<compile_context>
chip_gen: v6e
topology: v6e:2x2x1
jax: 0.10.0
libtpu: 0.0.40
codegen_flags: <defaults>
</compile_context>

<pallas_src>
import jax
import jax.numpy as jnp
import numpy as np
from jax.experimental import pallas as pl
from jax.experimental.pallas import tpu as pltpu

# Small, shape-consistent dims (original: embed=128, hidden=1024, layers=1, large vocab).
VOCAB = 256
EMBED = 64
HIDDEN = 128
NUM_LAYERS = 1
BATCH = 2
SEQ = 8


# -----------------------------------------------------------------------------
# Fused RNNLM kernel: embedding gather + gates_x precompute + LSTM recurrence +
# output projection, all in a single grid-less pallas_call.
# Kernel-side weights use gate-column order (i, f, o, g).
# -----------------------------------------------------------------------------
def _rnnlm_kernel(ids_ref, table_ref, wih_ref, whh_ref, b_ref, wl_ref, bl_ref,
                  h0_ref, c0_ref,
                  logits_ref, hn_ref, cn_ref):
    n_pad = ids_ref.shape[0]          # T * B_pad (time-major flattened, batch padded)
    v = table_ref.shape[0]
    b_pad = h0_ref.shape[1]           # padded batch (multiple of 8 sublanes)
    b_real = hn_ref.shape[1]          # real batch
    h_sz = h0_ref.shape[2]
    t_steps = n_pad // b_pad

    # ---- Embedding gather via one-hot matmul on the MXU (table is VMEM-resident). ----
    # NOTE: ids outside [0, V) silently yield a zero row (PyTorch nn.Embedding would raise);
    # default f32 dot precision is MXU bf16-pass — use Precision.HIGHEST / a true gather if
    # tighter accuracy is ever required.
    ids = ids_ref[...]                                                  # (n_pad, 1) int32
    onehot = (jax.lax.broadcasted_iota(jnp.int32, (n_pad, v), 1) == ids).astype(jnp.float32)
    emb = jnp.dot(onehot, table_ref[...],
                  preferred_element_type=jnp.float32)                   # (n_pad, E) time-major

    # ---- Input projection + bias hoisted out of the recurrence (one batched matmul). ----
    gates_x = jnp.dot(emb, wih_ref[...],
                      preferred_element_type=jnp.float32) + b_ref[...]   # (n_pad, 4H), i/f/o/g

    # ---- Recurrence: T fully-unrolled steps (T=8 static); per-step h kept in vregs. ----
    h = h0_ref[0]                      # (B_pad, H)
    c = c0_ref[0]                      # (B_pad, H)
    hs = []
    for t in range(t_steps):
        gx = gates_x[t * b_pad:(t + 1) * b_pad, :]                      # (B_pad, 4H) static slice
        gates = gx + jnp.dot(h, whh_ref[...],
                             preferred_element_type=jnp.float32)
        sig = jax.nn.sigmoid(gates[:, :3 * h_sz])                       # one EUP launch: i, f, o
        g_g = jnp.tanh(gates[:, 3 * h_sz:])                             # one EUP launch: g
        i_g = sig[:, 0 * h_sz:1 * h_sz]
        f_g = sig[:, 1 * h_sz:2 * h_sz]
        o_g = sig[:, 2 * h_sz:3 * h_sz]
        c = f_g * c + i_g * g_g
        h = o_g * jnp.tanh(c)
        hs.append(h)
    # TODO(synk): at real sequence lengths switch the unrolled loop to lax.fori_loop (or an
    # 'arbitrary' time grid axis) with a time-major (T, B, H) scratch to bound live ranges.

    hn_ref[0] = h[:b_real]
    cn_ref[0] = c[:b_real]

    # ---- Fused output projection: (T, Bp, H) -> (B, T, H) -> (B*T, H) @ (H, V). ----
    h_all = jnp.stack(hs, axis=0)                                       # (T, B_pad, H)
    h_bt = jnp.transpose(h_all, (1, 0, 2))[:b_real]                     # (B, T, H) batch-major
    h_flat = h_bt.reshape(b_real * t_steps, h_sz)                       # rows ordered b*T + t
    logits_ref[...] = (jnp.dot(h_flat, wl_ref[...],
                               preferred_element_type=jnp.float32) + bl_ref[...])


def rnnlm_forward(params, x_ids, states):
    h0, c0 = states
    B, T = x_ids.shape
    b_pad = max(8, ((B + 7) // 8) * 8)   # fill sublanes / MXU rows; padded rows are discarded

    # Time-major ids, batch padded (pad ids = 0; their rows never reach the outputs).
    ids_tm = jnp.zeros((T, b_pad), jnp.int32).at[:, :B].set(x_ids.astype(jnp.int32).T)
    ids_tm = ids_tm.reshape(T * b_pad, 1)
    h0p = jnp.zeros((NUM_LAYERS, b_pad, HIDDEN), jnp.float32).at[:, :B, :].set(h0)
    c0p = jnp.zeros((NUM_LAYERS, b_pad, HIDDEN), jnp.float32).at[:, :B, :].set(c0)

    n_pad = T * b_pad
    flops = 2 * (n_pad * VOCAB * EMBED            # one-hot gather matmul
                 + n_pad * EMBED * 4 * HIDDEN     # x @ W_ih
                 + n_pad * HIDDEN * 4 * HIDDEN    # h @ W_hh over T steps
                 + B * T * HIDDEN * VOCAB)        # output projection
    transcendentals = 5 * n_pad * HIDDEN          # 3H sigmoid + 2H tanh per row-step
    bytes_accessed = 4 * (VOCAB * EMBED + EMBED * 4 * HIDDEN + HIDDEN * 4 * HIDDEN
                          + 4 * HIDDEN + HIDDEN * VOCAB + VOCAB
                          + 2 * b_pad * HIDDEN + B * T * VOCAB + 2 * B * HIDDEN
                          + n_pad)

    vmem = lambda: pl.BlockSpec(memory_space=pltpu.MemorySpace.VMEM)
    logits, hn, cn = pl.pallas_call(
        _rnnlm_kernel,
        out_shape=(
            jax.ShapeDtypeStruct((B * T, VOCAB), jnp.float32),
            jax.ShapeDtypeStruct((NUM_LAYERS, B, HIDDEN), jnp.float32),
            jax.ShapeDtypeStruct((NUM_LAYERS, B, HIDDEN), jnp.float32),
        ),
        in_specs=[vmem() for _ in range(9)],
        out_specs=(vmem(), vmem(), vmem()),
        cost_estimate=pl.CostEstimate(flops=flops, transcendentals=transcendentals,
                                      bytes_accessed=bytes_accessed),
    )(ids_tm, params["embed"], params["wih_t_k"], params["whh_t_k"], params["b_lstm_k"],
      params["wl_t"], params["bl"], h0p, c0p)
    return logits, (hn, cn)


# -----------------------------------------------------------------------------
# Pure-JAX reference for correctness checking (exact gather + scan LSTM, PyTorch
# gate order i,f,g,o with the ORIGINAL unpermuted weights).
# -----------------------------------------------------------------------------
def rnnlm_ref(params, x_ids, states):
    h0, c0 = states
    H = HIDDEN
    emb = params["embed"][x_ids]                                  # (B, T, E)
    wih_t, whh_t, b = params["wih_t"], params["whh_t"], params["b_lstm"]

    def step(carry, x_t):
        h, c = carry
        gates = x_t @ wih_t + h @ whh_t + b[0]
        i = jax.nn.sigmoid(gates[:, :H])
        f = jax.nn.sigmoid(gates[:, H:2 * H])
        g = jnp.tanh(gates[:, 2 * H:3 * H])
        o = jax.nn.sigmoid(gates[:, 3 * H:])
        c = f * c + i * g
        h = o * jnp.tanh(c)
        return (h, c), h

    (hT, cT), outs = jax.lax.scan(step, (h0[0], c0[0]), emb.transpose(1, 0, 2))
    out_flat = outs.transpose(1, 0, 2).reshape(-1, H)
    logits = out_flat @ params["wl_t"] + params["bl"]
    return logits, (hT[None], cT[None])


def _ifgo_to_ifog(w):
    """Permute trailing 4H gate columns from PyTorch (i,f,g,o) to kernel (i,f,o,g)."""
    H = HIDDEN
    return jnp.concatenate([w[..., :2 * H], w[..., 3 * H:4 * H], w[..., 2 * H:3 * H]], axis=-1)


def init_params(key):
    ks = jax.random.split(key, 6)
    k_lstm = 1.0 / np.sqrt(HIDDEN)
    embed = jax.random.normal(ks[0], (VOCAB, EMBED), jnp.float32)
    wih = jax.random.uniform(ks[1], (4 * HIDDEN, EMBED), jnp.float32, -k_lstm, k_lstm)
    whh = jax.random.uniform(ks[2], (4 * HIDDEN, HIDDEN), jnp.float32, -k_lstm, k_lstm)
    bih = jax.random.uniform(ks[3], (4 * HIDDEN,), jnp.float32, -k_lstm, k_lstm)
    bhh = jax.random.uniform(ks[4], (4 * HIDDEN,), jnp.float32, -k_lstm, k_lstm)
    wl = jax.random.uniform(ks[5], (VOCAB, HIDDEN), jnp.float32, -k_lstm, k_lstm)
    bl = jnp.zeros((VOCAB,), jnp.float32)
    wih_t = wih.T                                   # (E, 4H), PyTorch gate order
    whh_t = whh.T                                   # (H, 4H)
    b_lstm = (bih + bhh).reshape(1, 4 * HIDDEN)
    return {
        # Reference / PyTorch-order weights.
        "embed": embed,
        "wih_t": wih_t,
        "whh_t": whh_t,
        "b_lstm": b_lstm,
        "wl_t": wl.T,                               # (H, V)
        "bl": bl.reshape(1, VOCAB),
        # Kernel weights: gate columns permuted offline to (i, f, o, g).
        "wih_t_k": _ifgo_to_ifog(wih_t),
        "whh_t_k": _ifgo_to_ifog(whh_t),
        "b_lstm_k": _ifgo_to_ifog(b_lstm),
    }


if __name__ == "__main__":
    key = jax.random.PRNGKey(0)
    k_p, k_x, k_h, k_c = jax.random.split(key, 4)
    params = init_params(k_p)

    x_ids = jax.random.randint(k_x, (BATCH, SEQ), 0, VOCAB, dtype=jnp.int32)
    h0 = jax.random.normal(k_h, (NUM_LAYERS, BATCH, HIDDEN), jnp.float32)
    c0 = jax.random.normal(k_c, (NUM_LAYERS, BATCH, HIDDEN), jnp.float32)

    logits, (hn, cn) = rnnlm_forward(params, x_ids, (h0, c0))
    jax.block_until_ready((logits, hn, cn))

    ref_logits, (ref_hn, ref_cn) = rnnlm_ref(params, x_ids, (h0, c0))
    # Tolerance covers the TPU MXU's default f32 matmul precision (bf16-pass) relative to
    # the exact XLA reference; shapes, gate order, batch-major row order and state threading
    # are checked exactly by the comparison.
    np.testing.assert_allclose(np.asarray(logits), np.asarray(ref_logits),
                               rtol=1e-2, atol=1e-2)
    np.testing.assert_allclose(np.asarray(hn), np.asarray(ref_hn),
                               rtol=1e-2, atol=1e-2)
    np.testing.assert_allclose(np.asarray(cn), np.asarray(ref_cn),
                               rtol=1e-2, atol=1e-2)

    assert logits.shape == (BATCH * SEQ, VOCAB)
    assert hn.shape == (NUM_LAYERS, BATCH, HIDDEN)
    assert cn.shape == (NUM_LAYERS, BATCH, HIDDEN)
    print("KERNEL_OK")
</pallas_src>

<mosaic_0001>
module attributes {stable_mosaic.version = 11 : i64} {
  func.func @_rnnlm_kernel(%arg0: memref<64x1xi32, #tpu.memory_space<vmem>>, %arg1: memref<256x64xf32, #tpu.memory_space<vmem>>, %arg2: memref<64x512xf32, #tpu.memory_space<vmem>>, %arg3: memref<128x512xf32, #tpu.memory_space<vmem>>, %arg4: memref<1x512xf32, #tpu.memory_space<vmem>>, %arg5: memref<128x256xf32, #tpu.memory_space<vmem>>, %arg6: memref<1x256xf32, #tpu.memory_space<vmem>>, %arg7: memref<1x8x128xf32, #tpu.memory_space<vmem>>, %arg8: memref<1x8x128xf32, #tpu.memory_space<vmem>>, %arg9: memref<16x256xf32, #tpu.memory_space<vmem>>, %arg10: memref<1x2x128xf32, #tpu.memory_space<vmem>>, %arg11: memref<1x2x128xf32, #tpu.memory_space<vmem>>) attributes {dimension_semantics = [], scalar_prefetch = 0 : i64, scratch_operands = 0 : i64, tpu.core_type = #tpu.core_type<tc>} {
    %c0 = arith.constant 0 : index
    %c0_0 = arith.constant 0 : index
    %0 = vector.load %arg0[%c0, %c0_0] : memref<64x1xi32, #tpu.memory_space<vmem>>, vector<64x1xi32>
    %1 = tpu.iota {dimensions = array<i32: 1>} : vector<64x256xi32>
    %2 = vector.broadcast %0 : vector<64x1xi32> to vector<64x256xi32>
    %3 = arith.cmpi eq, %1, %2 : vector<64x256xi32>
    %4 = arith.extui %3 : vector<64x256xi1> to vector<64x256xi32>
    %5 = arith.sitofp %4 : vector<64x256xi32> to vector<64x256xf32>
    %c0_1 = arith.constant 0 : index
    %c0_2 = arith.constant 0 : index
    %6 = vector.load %arg1[%c0_1, %c0_2] : memref<256x64xf32, #tpu.memory_space<vmem>>, vector<256x64xf32>
    %cst = arith.constant dense<0.000000e+00> : vector<64x64xf32>
    %7 = tpu.matmul %5, %6, %cst {dimension_numbers = #tpu.dot_dimension_numbers<[1], [0], [0], [1], [0, 0, 1, 1], [], []>} : vector<64x256xf32>, vector<256x64xf32>, vector<64x64xf32> -> vector<64x64xf32>
    %c0_3 = arith.constant 0 : index
    %c0_4 = arith.constant 0 : index
    %8 = vector.load %arg2[%c0_3, %c0_4] : memref<64x512xf32, #tpu.memory_space<vmem>>, vector<64x512xf32>
    %cst_5 = arith.constant dense<0.000000e+00> : vector<64x512xf32>
    %9 = tpu.matmul %7, %8, %cst_5 {dimension_numbers = #tpu.dot_dimension_numbers<[1], [0], [0], [1], [0, 0, 1, 1], [], []>} : vector<64x64xf32>, vector<64x512xf32>, vector<64x512xf32> -> vector<64x512xf32>
    %c0_6 = arith.constant 0 : index
    %c0_7 = arith.constant 0 : index
    %10 = vector.load %arg4[%c0_6, %c0_7] : memref<1x512xf32, #tpu.memory_space<vmem>>, vector<1x512xf32>
    %11 = vector.broadcast %10 : vector<1x512xf32> to vector<64x512xf32>
    %12 = arith.addf %9, %11 : vector<64x512xf32>
    %c0_8 = arith.constant 0 : index
    %c0_9 = arith.constant 0 : index
    %c0_10 = arith.constant 0 : index
    %13 = vector.load %arg7[%c0_8, %c0_9, %c0_10] : memref<1x8x128xf32, #tpu.memory_space<vmem>>, vector<1x8x128xf32>
    %14 = vector.shape_cast %13 : vector<1x8x128xf32> to vector<8x128xf32>
    %c0_11 = arith.constant 0 : index
    %c0_12 = arith.constant 0 : index
    %c0_13 = arith.constant 0 : index
    %15 = vector.load %arg8[%c0_11, %c0_12, %c0_13] : memref<1x8x128xf32, #tpu.memory_space<vmem>>, vector<1x8x128xf32>
    %16 = vector.shape_cast %15 : vector<1x8x128xf32> to vector<8x128xf32>
    %17 = vector.extract_strided_slice %12 {offsets = [0, 0], sizes = [8, 512], strides = [1, 1]} : vector<64x512xf32> to vector<8x512xf32>
    %c0_14 = arith.constant 0 : index
    %c0_15 = arith.constant 0 : index
    %18 = vector.load %arg3[%c0_14, %c0_15] : memref<128x512xf32, #tpu.memory_space<vmem>>, vector<128x512xf32>
    %cst_16 = arith.constant dense<0.000000e+00> : vector<8x512xf32>
    %19 = tpu.matmul %14, %18, %cst_16 {dimension_numbers = #tpu.dot_dimension_numbers<[1], [0], [0], [1], [0, 0, 1, 1], [], []>} : vector<8x128xf32>, vector<128x512xf32>, vector<8x512xf32> -> vector<8x512xf32>
    %20 = arith.addf %17, %19 : vector<8x512xf32>
    %21 = vector.extract_strided_slice %20 {offsets = [0, 0], sizes = [8, 384], strides = [1, 1]} : vector<8x512xf32> to vector<8x384xf32>
    %22 = arith.negf %21 : vector<8x384xf32>
    %23 = math.exp %22 : vector<8x384xf32>
    %cst_17 = arith.constant 1.000000e+00 : f32
    %24 = vector.broadcast %cst_17 : f32 to vector<8x384xf32>
    %25 = arith.addf %24, %23 : vector<8x384xf32>
    %26 = arith.divf %24, %25 : vector<8x384xf32>
    %27 = vector.extract_strided_slice %20 {offsets = [0, 384], sizes = [8, 128], strides = [1, 1]} : vector<8x512xf32> to vector<8x128xf32>
    %28 = math.tanh %27 : vector<8x128xf32>
    %29 = vector.extract_strided_slice %26 {offsets = [0, 0], sizes = [8, 128], strides = [1, 1]} : vector<8x384xf32> to vector<8x128xf32>
    %30 = vector.extract_strided_slice %26 {offsets = [0, 128], sizes = [8, 128], strides = [1, 1]} : vector<8x384xf32> to vector<8x128xf32>
    %31 = vector.extract_strided_slice %26 {offsets = [0, 256], sizes = [8, 128], strides = [1, 1]} : vector<8x384xf32> to vector<8x128xf32>
    %32 = arith.mulf %30, %16 : vector<8x128xf32>
    %33 = arith.mulf %29, %28 : vector<8x128xf32>
    %34 = arith.addf %32, %33 : vector<8x128xf32>
    %35 = math.tanh %34 : vector<8x128xf32>
    %36 = arith.mulf %31, %35 : vector<8x128xf32>
    %37 = vector.extract_strided_slice %12 {offsets = [8, 0], sizes = [8, 512], strides = [1, 1]} : vector<64x512xf32> to vector<8x512xf32>
    %c0_18 = arith.constant 0 : index
    %c0_19 = arith.constant 0 : index
    %38 = vector.load %arg3[%c0_18, %c0_19] : memref<128x512xf32, #tpu.memory_space<vmem>>, vector<128x512xf32>
    %cst_20 = arith.constant dense<0.000000e+00> : vector<8x512xf32>
    %39 = tpu.matmul %36, %38, %cst_20 {dimension_numbers = #tpu.dot_dimension_numbers<[1], [0], [0], [1], [0, 0, 1, 1], [], []>} : vector<8x128xf32>, vector<128x512xf32>, vector<8x512xf32> -> vector<8x512xf32>
    %40 = arith.addf %37, %39 : vector<8x512xf32>
    %41 = vector.extract_strided_slice %40 {offsets = [0, 0], sizes = [8, 384], strides = [1, 1]} : vector<8x512xf32> to vector<8x384xf32>
    %42 = arith.negf %41 : vector<8x384xf32>
    %43 = math.exp %42 : vector<8x384xf32>
    %cst_21 = arith.constant 1.000000e+00 : f32
    %44 = vector.broadcast %cst_21 : f32 to vector<8x384xf32>
    %45 = arith.addf %44, %43 : vector<8x384xf32>
    %46 = arith.divf %44, %45 : vector<8x384xf32>
    %47 = vector.extract_strided_slice %40 {offsets = [0, 384], sizes = [8, 128], strides = [1, 1]} : vector<8x512xf32> to vector<8x128xf32>
    %48 = math.tanh %47 : vector<8x128xf32>
    %49 = vector.extract_strided_slice %46 {offsets = [0, 0], sizes = [8, 128], strides = [1, 1]} : vector<8x384xf32> to vector<8x128xf32>
    %50 = vector.extract_strided_slice %46 {offsets = [0, 128], sizes = [8, 128], strides = [1, 1]} : vector<8x384xf32> to vector<8x128xf32>
    %51 = vector.extract_strided_slice %46 {offsets = [0, 256], sizes = [8, 128], strides = [1, 1]} : vector<8x384xf32> to vector<8x128xf32>
    %52 = arith.mulf %50, %34 : vector<8x128xf32>
    %53 = arith.mulf %49, %48 : vector<8x128xf32>
    %54 = arith.addf %52, %53 : vector<8x128xf32>
    %55 = math.tanh %54 : vector<8x128xf32>
    %56 = arith.mulf %51, %55 : vector<8x128xf32>
    %57 = vector.extract_strided_slice %12 {offsets = [16, 0], sizes = [8, 512], strides = [1, 1]} : vector<64x512xf32> to vector<8x512xf32>
    %c0_22 = arith.constant 0 : index
    %c0_23 = arith.constant 0 : index
    %58 = vector.load %arg3[%c0_22, %c0_23] : memref<128x512xf32, #tpu.memory_space<vmem>>, vector<128x512xf32>
    %cst_24 = arith.constant dense<0.000000e+00> : vector<8x512xf32>
    %59 = tpu.matmul %56, %58, %cst_24 {dimension_numbers = #tpu.dot_dimension_numbers<[1], [0], [0], [1], [0, 0, 1, 1], [], []>} : vector<8x128xf32>, vector<128x512xf32>, vector<8x512xf32> -> vector<8x512xf32>
    %60 = arith.addf %57, %59 : vector<8x512xf32>
    %61 = vector.extract_strided_slice %60 {offsets = [0, 0], sizes = [8, 384], strides = [1, 1]} : vector<8x512xf32> to vector<8x384xf32>
    %62 = arith.negf %61 : vector<8x384xf32>
    %63 = math.exp %62 : vector<8x384xf32>
    %cst_25 = arith.constant 1.000000e+00 : f32
    %64 = vector.broadcast %cst_25 : f32 to vector<8x384xf32>
    %65 = arith.addf %64, %63 : vector<8x384xf32>
    %66 = arith.divf %64, %65 : vector<8x384xf32>
    %67 = vector.extract_strided_slice %60 {offsets = [0, 384], sizes = [8, 128], strides = [1, 1]} : vector<8x512xf32> to vector<8x128xf32>
    %68 = math.tanh %67 : vector<8x128xf32>
    %69 = vector.extract_strided_slice %66 {offsets = [0, 0], sizes = [8, 128], strides = [1, 1]} : vector<8x384xf32> to vector<8x128xf32>
    %70 = vector.extract_strided_slice %66 {offsets = [0, 128], sizes = [8, 128], strides = [1, 1]} : vector<8x384xf32> to vector<8x128xf32>
    %71 = vector.extract_strided_slice %66 {offsets = [0, 256], sizes = [8, 128], strides = [1, 1]} : vector<8x384xf32> to vector<8x128xf32>
    %72 = arith.mulf %70, %54 : vector<8x128xf32>
    %73 = arith.mulf %69, %68 : vector<8x128xf32>
    %74 = arith.addf %72, %73 : vector<8x128xf32>
    %75 = math.tanh %74 : vector<8x128xf32>
    %76 = arith.mulf %71, %75 : vector<8x128xf32>
    %77 = vector.extract_strided_slice %12 {offsets = [24, 0], sizes = [8, 512], strides = [1, 1]} : vector<64x512xf32> to vector<8x512xf32>
    %c0_26 = arith.constant 0 : index
    %c0_27 = arith.constant 0 : index
    %78 = vector.load %arg3[%c0_26, %c0_27] : memref<128x512xf32, #tpu.memory_space<vmem>>, vector<128x512xf32>
    %cst_28 = arith.constant dense<0.000000e+00> : vector<8x512xf32>
    %79 = tpu.matmul %76, %78, %cst_28 {dimension_numbers = #tpu.dot_dimension_numbers<[1], [0], [0], [1], [0, 0, 1, 1], [], []>} : vector<8x128xf32>, vector<128x512xf32>, vector<8x512xf32> -> vector<8x512xf32>
    %80 = arith.addf %77, %79 : vector<8x512xf32>
    %81 = vector.extract_strided_slice %80 {offsets = [0, 0], sizes = [8, 384], strides = [1, 1]} : vector<8x512xf32> to vector<8x384xf32>
    %82 = arith.negf %81 : vector<8x384xf32>
    %83 = math.exp %82 : vector<8x384xf32>
    %cst_29 = arith.constant 1.000000e+00 : f32
    %84 = vector.broadcast %cst_29 : f32 to vector<8x384xf32>
    %85 = arith.addf %84, %83 : vector<8x384xf32>
    %86 = arith.divf %84, %85 : vector<8x384xf32>
    %87 = vector.extract_strided_slice %80 {offsets = [0, 384], sizes = [8, 128], strides = [1, 1]} : vector<8x512xf32> to vector<8x128xf32>
    %88 = math.tanh %87 : vector<8x128xf32>
    %89 = vector.extract_strided_slice %86 {offsets = [0, 0], sizes = [8, 128], strides = [1, 1]} : vector<8x384xf32> to vector<8x128xf32>
    %90 = vector.extract_strided_slice %86 {offsets = [0, 128], sizes = [8, 128], strides = [1, 1]} : vector<8x384xf32> to vector<8x128xf32>
    %91 = vector.extract_strided_slice %86 {offsets = [0, 256], sizes = [8, 128], strides = [1, 1]} : vector<8x384xf32> to vector<8x128xf32>
    %92 = arith.mulf %90, %74 : vector<8x128xf32>
    %93 = arith.mulf %89, %88 : vector<8x128xf32>
    %94 = arith.addf %92, %93 : vector<8x128xf32>
    %95 = math.tanh %94 : vector<8x128xf32>
    %96 = arith.mulf %91, %95 : vector<8x128xf32>
    %97 = vector.extract_strided_slice %12 {offsets = [32, 0], sizes = [8, 512], strides = [1, 1]} : vector<64x512xf32> to vector<8x512xf32>
    %c0_30 = arith.constant 0 : index
    %c0_31 = arith.constant 0 : index
    %98 = vector.load %arg3[%c0_30, %c0_31] : memref<128x512xf32, #tpu.memory_space<vmem>>, vector<128x512xf32>
    %cst_32 = arith.constant dense<0.000000e+00> : vector<8x512xf32>
    %99 = tpu.matmul %96, %98, %cst_32 {dimension_numbers = #tpu.dot_dimension_numbers<[1], [0], [0], [1], [0, 0, 1, 1], [], []>} : vector<8x128xf32>, vector<128x512xf32>, vector<8x512xf32> -> vector<8x512xf32>
    %100 = arith.addf %97, %99 : vector<8x512xf32>
    %101 = vector.extract_strided_slice %100 {offsets = [0, 0], sizes = [8, 384], strides = [1, 1]} : vector<8x512xf32> to vector<8x384xf32>
    %102 = arith.negf %101 : vector<8x384xf32>
    %103 = math.exp %102 : vector<8x384xf32>
    %cst_33 = arith.constant 1.000000e+00 : f32
    %104 = vector.broadcast %cst_33 : f32 to vector<8x384xf32>
    %105 = arith.addf %104, %103 : vector<8x384xf32>
    %106 = arith.divf %104, %105 : vector<8x384xf32>
    %107 = vector.extract_strided_slice %100 {offsets = [0, 384], sizes = [8, 128], strides = [1, 1]} : vector<8x512xf32> to vector<8x128xf32>
    %108 = math.tanh %107 : vector<8x128xf32>
    %109 = vector.extract_strided_slice %106 {offsets = [0, 0], sizes = [8, 128], strides = [1, 1]} : vector<8x384xf32> to vector<8x128xf32>
    %110 = vector.extract_strided_slice %106 {offsets = [0, 128], sizes = [8, 128], strides = [1, 1]} : vector<8x384xf32> to vector<8x128xf32>
    %111 = vector.extract_strided_slice %106 {offsets = [0, 256], sizes = [8, 128], strides = [1, 1]} : vector<8x384xf32> to vector<8x128xf32>
    %112 = arith.mulf %110, %94 : vector<8x128xf32>
    %113 = arith.mulf %109, %108 : vector<8x128xf32>
    %114 = arith.addf %112, %113 : vector<8x128xf32>
    %115 = math.tanh %114 : vector<8x128xf32>
    %116 = arith.mulf %111, %115 : vector<8x128xf32>
    %117 = vector.extract_strided_slice %12 {offsets = [40, 0], sizes = [8, 512], strides = [1, 1]} : vector<64x512xf32> to vector<8x512xf32>
    %c0_34 = arith.constant 0 : index
    %c0_35 = arith.constant 0 : index
    %118 = vector.load %arg3[%c0_34, %c0_35] : memref<128x512xf32, #tpu.memory_space<vmem>>, vector<128x512xf32>
    %cst_36 = arith.constant dense<0.000000e+00> : vector<8x512xf32>
    %119 = tpu.matmul %116, %118, %cst_36 {dimension_numbers = #tpu.dot_dimension_numbers<[1], [0], [0], [1], [0, 0, 1, 1], [], []>} : vector<8x128xf32>, vector<128x512xf32>, vector<8x512xf32> -> vector<8x512xf32>
    %120 = arith.addf %117, %119 : vector<8x512xf32>
    %121 = vector.extract_strided_slice %120 {offsets = [0, 0], sizes = [8, 384], strides = [1, 1]} : vector<8x512xf32> to vector<8x384xf32>
    %122 = arith.negf %121 : vector<8x384xf32>
    %123 = math.exp %122 : vector<8x384xf32>
    %cst_37 = arith.constant 1.000000e+00 : f32
    %124 = vector.broadcast %cst_37 : f32 to vector<8x384xf32>
    %125 = arith.addf %124, %123 : vector<8x384xf32>
    %126 = arith.divf %124, %125 : vector<8x384xf32>
    %127 = vector.extract_strided_slice %120 {offsets = [0, 384], sizes = [8, 128], strides = [1, 1]} : vector<8x512xf32> to vector<8x128xf32>
    %128 = math.tanh %127 : vector<8x128xf32>
    %129 = vector.extract_strided_slice %126 {offsets = [0, 0], sizes = [8, 128], strides = [1, 1]} : vector<8x384xf32> to vector<8x128xf32>
    %130 = vector.extract_strided_slice %126 {offsets = [0, 128], sizes = [8, 128], strides = [1, 1]} : vector<8x384xf32> to vector<8x128xf32>
    %131 = vector.extract_strided_slice %126 {offsets = [0, 256], sizes = [8, 128], strides = [1, 1]} : vector<8x384xf32> to vector<8x128xf32>
    %132 = arith.mulf %130, %114 : vector<8x128xf32>
    %133 = arith.mulf %129, %128 : vector<8x128xf32>
    %134 = arith.addf %132, %133 : vector<8x128xf32>
    %135 = math.tanh %134 : vector<8x128xf32>
    %136 = arith.mulf %131, %135 : vector<8x128xf32>
    %137 = vector.extract_strided_slice %12 {offsets = [48, 0], sizes = [8, 512], strides = [1, 1]} : vector<64x512xf32> to vector<8x512xf32>
    %c0_38 = arith.constant 0 : index
    %c0_39 = arith.constant 0 : index
    %138 = vector.load %arg3[%c0_38, %c0_39] : memref<128x512xf32, #tpu.memory_space<vmem>>, vector<128x512xf32>
    %cst_40 = arith.constant dense<0.000000e+00> : vector<8x512xf32>
    %139 = tpu.matmul %136, %138, %cst_40 {dimension_numbers = #tpu.dot_dimension_numbers<[1], [0], [0], [1], [0, 0, 1, 1], [], []>} : vector<8x128xf32>, vector<128x512xf32>, vector<8x512xf32> -> vector<8x512xf32>
    %140 = arith.addf %137, %139 : vector<8x512xf32>
    %141 = vector.extract_strided_slice %140 {offsets = [0, 0], sizes = [8, 384], strides = [1, 1]} : vector<8x512xf32> to vector<8x384xf32>
    %142 = arith.negf %141 : vector<8x384xf32>
    %143 = math.exp %142 : vector<8x384xf32>
    %cst_41 = arith.constant 1.000000e+00 : f32
    %144 = vector.broadcast %cst_41 : f32 to vector<8x384xf32>
    %145 = arith.addf %144, %143 : vector<8x384xf32>
    %146 = arith.divf %144, %145 : vector<8x384xf32>
    %147 = vector.extract_strided_slice %140 {offsets = [0, 384], sizes = [8, 128], strides = [1, 1]} : vector<8x512xf32> to vector<8x128xf32>
    %148 = math.tanh %147 : vector<8x128xf32>
    %149 = vector.extract_strided_slice %146 {offsets = [0, 0], sizes = [8, 128], strides = [1, 1]} : vector<8x384xf32> to vector<8x128xf32>
    %150 = vector.extract_strided_slice %146 {offsets = [0, 128], sizes = [8, 128], strides = [1, 1]} : vector<8x384xf32> to vector<8x128xf32>
    %151 = vector.extract_strided_slice %146 {offsets = [0, 256], sizes = [8, 128], strides = [1, 1]} : vector<8x384xf32> to vector<8x128xf32>
    %152 = arith.mulf %150, %134 : vector<8x128xf32>
    %153 = arith.mulf %149, %148 : vector<8x128xf32>
    %154 = arith.addf %152, %153 : vector<8x128xf32>
    %155 = math.tanh %154 : vector<8x128xf32>
    %156 = arith.mulf %151, %155 : vector<8x128xf32>
    %157 = vector.extract_strided_slice %12 {offsets = [56, 0], sizes = [8, 512], strides = [1, 1]} : vector<64x512xf32> to vector<8x512xf32>
    %c0_42 = arith.constant 0 : index
    %c0_43 = arith.constant 0 : index
    %158 = vector.load %arg3[%c0_42, %c0_43] : memref<128x512xf32, #tpu.memory_space<vmem>>, vector<128x512xf32>
    %cst_44 = arith.constant dense<0.000000e+00> : vector<8x512xf32>
    %159 = tpu.matmul %156, %158, %cst_44 {dimension_numbers = #tpu.dot_dimension_numbers<[1], [0], [0], [1], [0, 0, 1, 1], [], []>} : vector<8x128xf32>, vector<128x512xf32>, vector<8x512xf32> -> vector<8x512xf32>
    %160 = arith.addf %157, %159 : vector<8x512xf32>
    %161 = vector.extract_strided_slice %160 {offsets = [0, 0], sizes = [8, 384], strides = [1, 1]} : vector<8x512xf32> to vector<8x384xf32>
    %162 = arith.negf %161 : vector<8x384xf32>
    %163 = math.exp %162 : vector<8x384xf32>
    %cst_45 = arith.constant 1.000000e+00 : f32
    %164 = vector.broadcast %cst_45 : f32 to vector<8x384xf32>
    %165 = arith.addf %164, %163 : vector<8x384xf32>
    %166 = arith.divf %164, %165 : vector<8x384xf32>
    %167 = vector.extract_strided_slice %160 {offsets = [0, 384], sizes = [8, 128], strides = [1, 1]} : vector<8x512xf32> to vector<8x128xf32>
    %168 = math.tanh %167 : vector<8x128xf32>
    %169 = vector.extract_strided_slice %166 {offsets = [0, 0], sizes = [8, 128], strides = [1, 1]} : vector<8x384xf32> to vector<8x128xf32>
    %170 = vector.extract_strided_slice %166 {offsets = [0, 128], sizes = [8, 128], strides = [1, 1]} : vector<8x384xf32> to vector<8x128xf32>
    %171 = vector.extract_strided_slice %166 {offsets = [0, 256], sizes = [8, 128], strides = [1, 1]} : vector<8x384xf32> to vector<8x128xf32>
    %172 = arith.mulf %170, %154 : vector<8x128xf32>
    %173 = arith.mulf %169, %168 : vector<8x128xf32>
    %174 = arith.addf %172, %173 : vector<8x128xf32>
    %175 = math.tanh %174 : vector<8x128xf32>
    %176 = arith.mulf %171, %175 : vector<8x128xf32>
    %177 = vector.extract_strided_slice %176 {offsets = [0, 0], sizes = [2, 128], strides = [1, 1]} : vector<8x128xf32> to vector<2x128xf32>
    %c0_46 = arith.constant 0 : index
    %c0_47 = arith.constant 0 : index
    %c0_48 = arith.constant 0 : index
    %178 = vector.load %arg10[%c0_46, %c0_47, %c0_48] : memref<1x2x128xf32, #tpu.memory_space<vmem>>, vector<1x2x128xf32>
    %179 = vector.shape_cast %178 : vector<1x2x128xf32> to vector<2x128xf32>
    %180 = vector.shape_cast %177 : vector<2x128xf32> to vector<1x2x128xf32>
    tpu.vector_store %arg10[%c0_46, %c0_47, %c0_48], %180 {strides = array<i32>} : memref<1x2x128xf32, #tpu.memory_space<vmem>>, vector<1x2x128xf32>,
    %181 = vector.extract_strided_slice %174 {offsets = [0, 0], sizes = [2, 128], strides = [1, 1]} : vector<8x128xf32> to vector<2x128xf32>
    %c0_49 = arith.constant 0 : index
    %c0_50 = arith.constant 0 : index
    %c0_51 = arith.constant 0 : index
    %182 = vector.load %arg11[%c0_49, %c0_50, %c0_51] : memref<1x2x128xf32, #tpu.memory_space<vmem>>, vector<1x2x128xf32>
    %183 = vector.shape_cast %182 : vector<1x2x128xf32> to vector<2x128xf32>
    %184 = vector.shape_cast %181 : vector<2x128xf32> to vector<1x2x128xf32>
    tpu.vector_store %arg11[%c0_49, %c0_50, %c0_51], %184 {strides = array<i32>} : memref<1x2x128xf32, #tpu.memory_space<vmem>>, vector<1x2x128xf32>,
    %185 = vector.shape_cast %36 : vector<8x128xf32> to vector<1x8x128xf32>
    %186 = vector.shape_cast %56 : vector<8x128xf32> to vector<1x8x128xf32>
    %187 = vector.shape_cast %76 : vector<8x128xf32> to vector<1x8x128xf32>
    %188 = vector.shape_cast %96 : vector<8x128xf32> to vector<1x8x128xf32>
    %189 = vector.shape_cast %116 : vector<8x128xf32> to vector<1x8x128xf32>
    %190 = vector.shape_cast %136 : vector<8x128xf32> to vector<1x8x128xf32>
    %191 = vector.shape_cast %156 : vector<8x128xf32> to vector<1x8x128xf32>
    %192 = vector.shape_cast %176 : vector<8x128xf32> to vector<1x8x128xf32>
    %193 = tpu.concatenate %185, %186, %187, %188, %189, %190, %191, %192 in 0 : vector<1x8x128xf32>, vector<1x8x128xf32>, vector<1x8x128xf32>, vector<1x8x128xf32>, vector<1x8x128xf32>, vector<1x8x128xf32>, vector<1x8x128xf32>, vector<1x8x128xf32> -> vector<8x8x128xf32>
    %194 = tpu.transpose %193, [1, 0, 2] : vector<8x8x128xf32> -> vector<8x8x128xf32>
    %195 = vector.extract_strided_slice %194 {offsets = [0, 0, 0], sizes = [2, 8, 128], strides = [1, 1, 1]} : vector<8x8x128xf32> to vector<2x8x128xf32>
    %196 = vector.shape_cast %195 : vector<2x8x128xf32> to vector<16x128xf32>
    %c0_52 = arith.constant 0 : index
    %c0_53 = arith.constant 0 : index
    %197 = vector.load %arg5[%c0_52, %c0_53] : memref<128x256xf32, #tpu.memory_space<vmem>>, vector<128x256xf32>
    %cst_54 = arith.constant dense<0.000000e+00> : vector<16x256xf32>
    %198 = tpu.matmul %196, %197, %cst_54 {dimension_numbers = #tpu.dot_dimension_numbers<[1], [0], [0], [1], [0, 0, 1, 1], [], []>} : vector<16x128xf32>, vector<128x256xf32>, vector<16x256xf32> -> vector<16x256xf32>
    %c0_55 = arith.constant 0 : index
    %c0_56 = arith.constant 0 : index
    %199 = vector.load %arg6[%c0_55, %c0_56] : memref<1x256xf32, #tpu.memory_space<vmem>>, vector<1x256xf32>
    %200 = vector.broadcast %199 : vector<1x256xf32> to vector<16x256xf32>
    %201 = arith.addf %198, %200 : vector<16x256xf32>
    %c0_57 = arith.constant 0 : index
    %c0_58 = arith.constant 0 : index
    %202 = vector.load %arg9[%c0_57, %c0_58] : memref<16x256xf32, #tpu.memory_space<vmem>>, vector<16x256xf32>
    tpu.vector_store %arg9[%c0_57, %c0_58], %201 {strides = array<i32>} : memref<16x256xf32, #tpu.memory_space<vmem>>, vector<16x256xf32>,
    return
  }
}

</mosaic_0001>

<llo_original>
// kernel: tpu_custom_call.1
$region0: #{tpu_custom_call.1}
  #allocation0 [shape = 'u32[]', space=smem, size = 0x4, offset = 0x4, fixed_abs, tag = 'smem constant byte address 0x4 - core index']
  #allocation1 [shape = 'u32[144,128]{1,0:T(1,128)}', space=vmem, size = 0x12000, scoped, tag = 'internal scratch']
  %s0 = inlined_call_operand.vmem [shape: s32[64,1], index: 0, kind: input, shape index: {}]
  %s1 = inlined_call_operand.vmem [shape: f32[256,64], index: 1, kind: input, shape index: {}]
  %s2 = inlined_call_operand.vmem [shape: f32[64,512], index: 2, kind: input, shape index: {}]
  %s3 = inlined_call_operand.hbm [shape: f32[128,512], index: 3, kind: input, shape index: {}]
  %s4 = inlined_call_operand.vmem [shape: f32[1,512], index: 4, kind: input, shape index: {}]
  %s5 = inlined_call_operand.hbm [shape: f32[128,256], index: 5, kind: input, shape index: {}]
  %s6 = inlined_call_operand.vmem [shape: f32[1,256], index: 6, kind: input, shape index: {}]
  %s7 = inlined_call_operand.vmem [shape: f32[1,8,128], index: 7, kind: input, shape index: {}]
  %s8 = inlined_call_operand.vmem [shape: f32[1,8,128], index: 8, kind: input, shape index: {}]
  %s9 = inlined_call_operand.hbm [shape: f32[16,256], index: 9, kind: output, shape index: {0}]
  %s10 = inlined_call_operand.hbm [shape: f32[1,2,128], index: 10, kind: output, shape index: {1}]
  %s11 = inlined_call_operand.hbm [shape: f32[1,2,128], index: 11, kind: output, shape index: {2}]
  %12 = xla_tuple %s9, %s10, %s11
  %s13 = sld [smem:[#allocation0]]
  $region70: #{tpu_custom_call.1} parent=0
    _
  %s15 = ssub.s32 1, %s13
  %s16 = scalar_select 0, %s15, %s13
  $region1: #{tpu_custom_call.1} parent=0
    #allocation2 [shape = 'u8[262144]{0}', space=vmem, size = 0x40000, scoped, tag = 'input window, operand 3, single buffered']
    #allocation3 [shape = 's32[1]{0}', space=sflag, size = 0x4, scoped, tag = 'scoped memory for tpu_custom_call.1']
    #allocation4 [shape = 's32[1]{0}', space=sflag, size = 0x4, scoped, tag = 'scoped memory for tpu_custom_call.1']
    #allocation5 [shape = 'u8[131072]{0}', space=vmem, size = 0x20000, scoped, tag = 'input window, operand 5, single buffered']
    #allocation6 [shape = 's32[1]{0}', space=sflag, size = 0x4, scoped, tag = 'scoped memory for tpu_custom_call.1']
    #allocation7 [shape = 'u8[16384]{0}', space=vmem, size = 0x4000, scoped, tag = 'output window, operand 0, single buffered']
    #allocation8 [shape = 'u8[1024]{0}', space=vmem, size = 0x400, scoped, tag = 'output window, operand 1, single buffered']
    #allocation9 [shape = 's32[1]{0}', space=sflag, size = 0x4, scoped, tag = 'scoped memory for tpu_custom_call.1']
    #allocation10 [shape = 'u8[1024]{0}', space=vmem, size = 0x400, scoped, tag = 'output window, operand 2, single buffered']
    %17 = vsyncpa [#allocation3], 0
    %18 = vsyncpa [#allocation6], 0
    %19 = vsyncpa [#allocation4], 0
    %20 = vsyncpa [#allocation9], 0
    // Predicated region
    $region2: #{tpu_custom_call.1} parent=1 // pred_check
      _
    $region3: #{tpu_custom_call.1} parent=1 // pred_check_branch
      %22 = sbr.rel (0) target = $region5
    $region4: #{tpu_custom_call.1} parent=1 // pred_region
      _
    $region5: #{tpu_custom_call.1} parent=1 // pred_fallthru
      _
    // Predicated region
    $region6: #{tpu_custom_call.1} parent=1 // pred_check
      _
    $region7: #{tpu_custom_call.1} parent=1 // pred_check_branch
      %24 = sbr.rel (0) target = $region9
    $region8: #{tpu_custom_call.1} parent=1 // pred_region
      _
    $region9: #{tpu_custom_call.1} parent=1 // pred_fallthru
      _
    // Predicated region
    $region10: #{tpu_custom_call.1} parent=1 // pred_check
      _
    $region11: #{tpu_custom_call.1} parent=1 // pred_check_branch
      %26 = sbr.rel (0) target = $region13
    $region12: #{tpu_custom_call.1} parent=1 // pred_region
      _
    $region13: #{tpu_custom_call.1} parent=1 // pred_fallthru
      _
    // Predicated region
    $region14: #{tpu_custom_call.1} parent=1 // pred_check
      _
    $region15: #{tpu_custom_call.1} parent=1 // pred_check_branch
      %28 = sbr.rel (0) target = $region17
    $region16: #{tpu_custom_call.1} parent=1 // pred_region
      %s30 = ssub.s32 8192, 8192
      %31 = vsyncadd [#allocation3], %s30
      %s32 = sshll.u32 [#allocation2], 4
      %s33 = int_to_ptr.vmem [resolvable:$true] %s32
      %38 = dma.hbm_to_vmem [thread:$0]  %s3, 8192, %s33, [#allocation3], 512, 512, 32
    $region17: #{tpu_custom_call.1} parent=1 // pred_fallthru
      _
    // Predicated region
    $region18: #{tpu_custom_call.1} parent=1 // pred_check
      _
    $region19: #{tpu_custom_call.1} parent=1 // pred_check_branch
      %40 = sbr.rel (0) target = $region21
    $region20: #{tpu_custom_call.1} parent=1 // pred_region
      _
    $region21: #{tpu_custom_call.1} parent=1 // pred_fallthru
      _
    // Predicated region
    $region22: #{tpu_custom_call.1} parent=1 // pred_check
      _
    $region23: #{tpu_custom_call.1} parent=1 // pred_check_branch
      %42 = sbr.rel (0) target = $region25
    $region24: #{tpu_custom_call.1} parent=1 // pred_region
      %s44 = ssub.s32 4096, 4096
      %45 = vsyncadd [#allocation6], %s44
      %s46 = sshll.u32 [#allocation5], 4
      %s47 = int_to_ptr.vmem [resolvable:$true] %s46
      %52 = dma.hbm_to_vmem [thread:$0]  %s5, 4096, %s47, [#allocation6], 256, 256, 16
    $region25: #{tpu_custom_call.1} parent=1 // pred_fallthru
      _
    // Predicated region
    $region26: #{tpu_custom_call.1} parent=1 // pred_check
      _
    $region27: #{tpu_custom_call.1} parent=1 // pred_check_branch
      %54 = sbr.rel (0) target = $region29
    $region28: #{tpu_custom_call.1} parent=1 // pred_region
      _
    $region29: #{tpu_custom_call.1} parent=1 // pred_fallthru
      _
    // Predicated region
    $region30: #{tpu_custom_call.1} parent=1 // pred_check
      _
    $region31: #{tpu_custom_call.1} parent=1 // pred_check_branch
      %56 = sbr.rel (0) target = $region33
    $region32: #{tpu_custom_call.1} parent=1 // pred_region
      _
    $region33: #{tpu_custom_call.1} parent=1 // pred_fallthru
      _
    // Predicated region
    $region34: #{tpu_custom_call.1} parent=1 // pred_check
      _
    $region35: #{tpu_custom_call.1} parent=1 // pred_check_branch
      %58 = sbr.rel (0) target = $region37
    $region36: #{tpu_custom_call.1} parent=1 // pred_region
      _
    $region37: #{tpu_custom_call.1} parent=1 // pred_fallthru
      _
    // Predicated region
    $region38: #{tpu_custom_call.1} parent=1 // pred_check
      _
    $region39: #{tpu_custom_call.1} parent=1 // pred_check_branch
      %60 = sbr.rel (0) target = $region41
    $region40: #{tpu_custom_call.1} parent=1 // pred_region
      %61 = dma.done [#allocation3], 8192
    $region41: #{tpu_custom_call.1} parent=1 // pred_fallthru
      _
    // Predicated region
    $region42: #{tpu_custom_call.1} parent=1 // pred_check
      _
    $region43: #{tpu_custom_call.1} parent=1 // pred_check_branch
      %63 = sbr.rel (0) target = $region45
    $region44: #{tpu_custom_call.1} parent=1 // pred_region
      %64 = dma.done [#allocation6], 4096
    $region45: #{tpu_custom_call.1} parent=1 // pred_fallthru
      _
    %v65 = vld [vmem:[%s0] sm:$0xff]
    %v66 = vld [vmem:[%s0 + $0x8] sm:$0xff]
    %v67 = vld [vmem:[%s0 + $0x10] sm:$0xff]
    %v68 = vld [vmem:[%s0 + $0x18] sm:$0xff]
    %v69 = vld [vmem:[%s0 + $0x20] sm:$0xff]
    %v70 = vld [vmem:[%s0 + $0x28] sm:$0xff]
    %v71 = vld [vmem:[%s0 + $0x30] sm:$0xff]
    %v72 = vld [vmem:[%s0 + $0x38] sm:$0xff]
    %v73 = vlaneseq
    %v74 = vand.u32 %v73, 127
    %v75 = vadd.s32 %v74, 128
    %76 = vset.pattern.permute.xlu0 0
    %77 = vperm.xlu0 %76, %v65
    %v78 = vpop.permute.xlu0 %77
    %79 = vset.pattern.permute.xlu0 0
    %80 = vperm.xlu0 %79, %v66
    %v81 = vpop.permute.xlu0 %80
    %82 = vset.pattern.permute.xlu0 0
    %83 = vperm.xlu0 %82, %v67
    %v84 = vpop.permute.xlu0 %83
    %85 = vset.pattern.permute.xlu0 0
    %86 = vperm.xlu0 %85, %v68
    %v87 = vpop.permute.xlu0 %86
    %88 = vset.pattern.permute.xlu0 0
    %89 = vperm.xlu0 %88, %v69
    %v90 = vpop.permute.xlu0 %89
    %91 = vset.pattern.permute.xlu0 0
    %92 = vperm.xlu0 %91, %v70
    %v93 = vpop.permute.xlu0 %92
    %94 = vset.pattern.permute.xlu0 0
    %95 = vperm.xlu0 %94, %v71
    %v96 = vpop.permute.xlu0 %95
    %97 = vset.pattern.permute.xlu0 0
    %98 = vperm.xlu0 %97, %v72
    %v99 = vpop.permute.xlu0 %98
    %vm100 = vcmp.eq.s32.totalorder %v74, %v78
    %vm101 = vcmp.eq.s32.totalorder %v75, %v78
    %vm102 = vcmp.eq.s32.totalorder %v74, %v81
    %vm103 = vcmp.eq.s32.totalorder %v75, %v81
    %vm104 = vcmp.eq.s32.totalorder %v74, %v84
    %vm105 = vcmp.eq.s32.totalorder %v75, %v84
    %vm106 = vcmp.eq.s32.totalorder %v74, %v87
    %vm107 = vcmp.eq.s32.totalorder %v75, %v87
    %vm108 = vcmp.eq.s32.totalorder %v74, %v90
    %vm109 = vcmp.eq.s32.totalorder %v75, %v90
    %vm110 = vcmp.eq.s32.totalorder %v74, %v93
    %vm111 = vcmp.eq.s32.totalorder %v75, %v93
    %vm112 = vcmp.eq.s32.totalorder %v74, %v96
    %vm113 = vcmp.eq.s32.totalorder %v75, %v96
    %vm114 = vcmp.eq.s32.totalorder %v74, %v99
    %vm115 = vcmp.eq.s32.totalorder %v75, %v99
    %v116 = vsel %vm100, 1, 0
    %v117 = vsel %vm101, 1, 0
    %v118 = vsel %vm102, 1, 0
    %v119 = vsel %vm103, 1, 0
    %v120 = vsel %vm104, 1, 0
    %v121 = vsel %vm105, 1, 0
    %v122 = vsel %vm106, 1, 0
    %v123 = vsel %vm107, 1, 0
    %v124 = vsel %vm108, 1, 0
    %v125 = vsel %vm109, 1, 0
    %v126 = vsel %vm110, 1, 0
    %v127 = vsel %vm111, 1, 0
    %v128 = vsel %vm112, 1, 0
    %v129 = vsel %vm113, 1, 0
    %v130 = vsel %vm114, 1, 0
    %v131 = vsel %vm115, 1, 0
    %v132 = vcvt.s32.f32 %v116
    %v133 = vcvt.s32.f32 %v117
    %v134 = vcvt.s32.f32 %v118
    %v135 = vcvt.s32.f32 %v119
    %v136 = vcvt.s32.f32 %v120
    %v137 = vcvt.s32.f32 %v121
    %v138 = vcvt.s32.f32 %v122
    %v139 = vcvt.s32.f32 %v123
    %v140 = vcvt.s32.f32 %v124
    %v141 = vcvt.s32.f32 %v125
    %v142 = vcvt.s32.f32 %v126
    %v143 = vcvt.s32.f32 %v127
    %v144 = vcvt.s32.f32 %v128
    %v145 = vcvt.s32.f32 %v129
    %v146 = vcvt.s32.f32 %v130
    %v147 = vcvt.s32.f32 %v131
    %v148 = vld [vmem:[%s1] sm:$0xff]
    %v149 = vld [vmem:[%s1 + $0x8] sm:$0xff]
    %v150 = vld [vmem:[%s1 + $0x10] sm:$0xff]
    %v151 = vld [vmem:[%s1 + $0x18] sm:$0xff]
    %v152 = vld [vmem:[%s1 + $0x20] sm:$0xff]
    %v153 = vld [vmem:[%s1 + $0x28] sm:$0xff]
    %v154 = vld [vmem:[%s1 + $0x30] sm:$0xff]
    %v155 = vld [vmem:[%s1 + $0x38] sm:$0xff]
    %v156 = vld [vmem:[%s1 + $0x40] sm:$0xff]
    %v157 = vld [vmem:[%s1 + $0x48] sm:$0xff]
    %v158 = vld [vmem:[%s1 + $0x50] sm:$0xff]
    %v159 = vld [vmem:[%s1 + $0x58] sm:$0xff]
    %v160 = vld [vmem:[%s1 + $0x60] sm:$0xff]
    %v161 = vld [vmem:[%s1 + $0x68] sm:$0xff]
    %v162 = vld [vmem:[%s1 + $0x70] sm:$0xff]
    %v163 = vld [vmem:[%s1 + $0x78] sm:$0xff]
    %v164 = vld [vmem:[%s1 + $0x80] sm:$0xff]
    %v165 = vld [vmem:[%s1 + $0x88] sm:$0xff]
    %v166 = vld [vmem:[%s1 + $0x90] sm:$0xff]
    %v167 = vld [vmem:[%s1 + $0x98] sm:$0xff]
    %v168 = vld [vmem:[%s1 + $0xa0] sm:$0xff]
    %v169 = vld [vmem:[%s1 + $0xa8] sm:$0xff]
    %v170 = vld [vmem:[%s1 + $0xb0] sm:$0xff]
    %v171 = vld [vmem:[%s1 + $0xb8] sm:$0xff]
    %v172 = vld [vmem:[%s1 + $0xc0] sm:$0xff]
    %v173 = vld [vmem:[%s1 + $0xc8] sm:$0xff]
    %v174 = vld [vmem:[%s1 + $0xd0] sm:$0xff]
    %v175 = vld [vmem:[%s1 + $0xd8] sm:$0xff]
    %v176 = vld [vmem:[%s1 + $0xe0] sm:$0xff]
    %v177 = vld [vmem:[%s1 + $0xe8] sm:$0xff]
    %v178 = vld [vmem:[%s1 + $0xf0] sm:$0xff]
    %v179 = vld [vmem:[%s1 + $0xf8] sm:$0xff]
    %180 = vmatprep.subr.mxu0 0.0
    %181 = vmatpush1.msra.mxu0 %v163
    %182 = vmatprep.subr.mxu0 0.0
    %183 = vmatpush1.msra.mxu0 %v162
    %184 = vmatprep.subr.mxu0 0.0
    %185 = vmatpush1.msra.mxu0 %v161
    %186 = vmatprep.subr.mxu0 0.0
    %187 = vmatpush1.msra.mxu0 %v160
    %188 = vmatprep.subr.mxu0 0.0
    %189 = vmatpush1.msra.mxu0 %v159
    %190 = vmatprep.subr.mxu0 0.0
    %191 = vmatpush1.msra.mxu0 %v158
    %192 = vmatprep.subr.mxu0 0.0
    %193 = vmatpush1.msra.mxu0 %v157
    %194 = vmatprep.subr.mxu0 0.0
    %195 = vmatpush1.msra.mxu0 %v156
    %196 = vmatprep.subr.mxu0 0.0
    %197 = vmatpush1.msra.mxu0 %v155
    %198 = vmatprep.subr.mxu0 0.0
    %199 = vmatpush1.msra.mxu0 %v154
    %200 = vmatprep.subr.mxu0 0.0
    %201 = vmatpush1.msra.mxu0 %v153
    %202 = vmatprep.subr.mxu0 0.0
    %203 = vmatpush1.msra.mxu0 %v152
    %204 = vmatprep.subr.mxu0 0.0
    %205 = vmatpush1.msra.mxu0 %v151
    %206 = vmatprep.subr.mxu0 0.0
    %207 = vmatpush1.msra.mxu0 %v150
    %208 = vmatprep.subr.mxu0 0.0
    %209 = vmatpush1.msra.mxu0 %v149
    %210 = vmatprep.subr.mxu0 0.0
    %211 = vmatpush1.msra.mxu0 %v148
    %212 = vmatprep.subr.mxu0 0.0
    %213 = vmatpush2.msra.mxu0 %v179
    %214 = vmatprep.subr.mxu0 0.0
    %215 = vmatpush2.msra.mxu0 %v178
    %216 = vmatprep.subr.mxu0 0.0
    %217 = vmatpush2.msra.mxu0 %v177
    %218 = vmatprep.subr.mxu0 0.0
    %219 = vmatpush2.msra.mxu0 %v176
    %220 = vmatprep.subr.mxu0 0.0
    %221 = vmatpush2.msra.mxu0 %v175
    %222 = vmatprep.subr.mxu0 0.0
    %223 = vmatpush2.msra.mxu0 %v174
    %224 = vmatprep.subr.mxu0 0.0
    %225 = vmatpush2.msra.mxu0 %v173
    %226 = vmatprep.subr.mxu0 0.0
    %227 = vmatpush2.msra.mxu0 %v172
    %228 = vmatprep.subr.mxu0 0.0
    %229 = vmatpush2.msra.mxu0 %v171
    %230 = vmatprep.subr.mxu0 0.0
    %231 = vmatpush2.msra.mxu0 %v170
    %232 = vmatprep.subr.mxu0 0.0
    %233 = vmatpush2.msra.mxu0 %v169
    %234 = vmatprep.subr.mxu0 0.0
    %235 = vmatpush2.msra.mxu0 %v168
    %236 = vmatprep.subr.mxu0 0.0
    %237 = vmatpush2.msra.mxu0 %v167
    %238 = vmatprep.subr.mxu0 0.0
    %239 = vmatpush2.msra.mxu0 %v166
    %240 = vmatprep.subr.mxu0 0.0
    %241 = vmatpush2.msra.mxu0 %v165
    %242 = vmatprep.subr.mxu0 0.0
    %243 = vmatpush2.msra.mxu0 %v164
    %244 = vmatprep.mubr.f32.mxu0 %v133
    %245 = vmatmul.mubr.f32.gmra.mxu0 %v132
    %v246 = vpop.f32.mrf.mxu0
    %v247 = vadd.f32 0.0, %v246
    %v248 = vpop.f32.mrf.mxu0
    %249 = vmatprep.mubr.f32.mxu0 %v135
    %250 = vmatmul.mubr.f32.gmra.mxu0 %v134
    %v251 = vpop.f32.mrf.mxu0
    %v252 = vadd.f32 0.0, %v251
    %v253 = vpop.f32.mrf.mxu0
    %254 = vmatprep.mubr.f32.mxu0 %v137
    %255 = vmatmul.mubr.f32.gmra.mxu0 %v136
    %v256 = vpop.f32.mrf.mxu0
    %v257 = vadd.f32 0.0, %v256
    %v258 = vpop.f32.mrf.mxu0
    %259 = vmatprep.mubr.f32.mxu0 %v139
    %260 = vmatmul.mubr.f32.gmra.mxu0 %v138
    %v261 = vpop.f32.mrf.mxu0
    %v262 = vadd.f32 0.0, %v261
    %v263 = vpop.f32.mrf.mxu0
    %264 = vmatprep.mubr.f32.mxu0 %v141
    %265 = vmatmul.mubr.f32.gmra.mxu0 %v140
    %v266 = vpop.f32.mrf.mxu0
    %v267 = vadd.f32 0.0, %v266
    %v268 = vpop.f32.mrf.mxu0
    %269 = vmatprep.mubr.f32.mxu0 %v143
    %270 = vmatmul.mubr.f32.gmra.mxu0 %v142
    %v271 = vpop.f32.mrf.mxu0
    %v272 = vadd.f32 0.0, %v271
    %v273 = vpop.f32.mrf.mxu0
    %274 = vmatprep.mubr.f32.mxu0 %v145
    %275 = vmatmul.mubr.f32.gmra.mxu0 %v144
    %v276 = vpop.f32.mrf.mxu0
    %v277 = vadd.f32 0.0, %v276
    %v278 = vpop.f32.mrf.mxu0
    %279 = vmatprep.mubr.f32.mxu0 %v147
    %280 = vmatmul.mubr.f32.gmra.mxu0 %v146
    %v281 = vpop.f32.mrf.mxu0
    %v282 = vadd.f32 0.0, %v281
    %v283 = vpop.f32.mrf.mxu0
    %284 = vdwg.mxu0
    %v285 = vld [vmem:[%s2] sm:$0xff]
    %v286 = vld [vmem:[%s2 + $0x8] sm:$0xff]
    %v287 = vld [vmem:[%s2 + $0x10] sm:$0xff]
    %v288 = vld [vmem:[%s2 + $0x18] sm:$0xff]
    %v289 = vld [vmem:[%s2 + $0x20] sm:$0xff]
    %v290 = vld [vmem:[%s2 + $0x28] sm:$0xff]
    %v291 = vld [vmem:[%s2 + $0x30] sm:$0xff]
    %v292 = vld [vmem:[%s2 + $0x38] sm:$0xff]
    %v293 = vld [vmem:[%s2 + $0x40] sm:$0xff]
    %v294 = vld [vmem:[%s2 + $0x48] sm:$0xff]
    %v295 = vld [vmem:[%s2 + $0x50] sm:$0xff]
    %v296 = vld [vmem:[%s2 + $0x58] sm:$0xff]
    %v297 = vld [vmem:[%s2 + $0x60] sm:$0xff]
    %v298 = vld [vmem:[%s2 + $0x68] sm:$0xff]
    %v299 = vld [vmem:[%s2 + $0x70] sm:$0xff]
    %v300 = vld [vmem:[%s2 + $0x78] sm:$0xff]
    %v301 = vld [vmem:[%s2 + $0x80] sm:$0xff]
    %v302 = vld [vmem:[%s2 + $0x88] sm:$0xff]
    %v303 = vld [vmem:[%s2 + $0x90] sm:$0xff]
    %v304 = vld [vmem:[%s2 + $0x98] sm:$0xff]
    %v305 = vld [vmem:[%s2 + $0xa0] sm:$0xff]
    %v306 = vld [vmem:[%s2 + $0xa8] sm:$0xff]
    %v307 = vld [vmem:[%s2 + $0xb0] sm:$0xff]
    %v308 = vld [vmem:[%s2 + $0xb8] sm:$0xff]
    %v309 = vld [vmem:[%s2 + $0xc0] sm:$0xff]
    %v310 = vld [vmem:[%s2 + $0xc8] sm:$0xff]
    %v311 = vld [vmem:[%s2 + $0xd0] sm:$0xff]
    %v312 = vld [vmem:[%s2 + $0xd8] sm:$0xff]
    %v313 = vld [vmem:[%s2 + $0xe0] sm:$0xff]
    %v314 = vld [vmem:[%s2 + $0xe8] sm:$0xff]
    %v315 = vld [vmem:[%s2 + $0xf0] sm:$0xff]
    %v316 = vld [vmem:[%s2 + $0xf8] sm:$0xff]
    %v317 = vld [vmem:[%s4] sm:$0xf]
    %v319 = vlaneseq
    %v320 = vshrl.u32 %v319, 7
    %v321 = vsub.s32 0, %v320
    %v322 = vrot.slane %v317, %v321
    %v323 = vlaneseq
    %v324 = vshrl.u32 %v323, 7
    %v325 = vsub.s32 1, %v324
    %v326 = vrot.slane %v317, %v325
    %v327 = vlaneseq
    %v328 = vshrl.u32 %v327, 7
    %v329 = vsub.s32 2, %v328
    %v330 = vrot.slane %v317, %v329
    %v331 = vlaneseq
    %v332 = vshrl.u32 %v331, 7
    %v333 = vsub.s32 3, %v332
    %v334 = vrot.slane %v317, %v333
    %vm339 = vcmask 523264
    %v341 = vsel %vm339, %v247, 0
    %v344 = vsel %vm339, %v252, 0
    %v347 = vsel %vm339, %v257, 0
    %v350 = vsel %vm339, %v262, 0
    %v353 = vsel %vm339, %v267, 0
    %v356 = vsel %vm339, %v272, 0
    %v359 = vsel %vm339, %v277, 0
    %v362 = vsel %vm339, %v282, 0
    %364 = vmatprep.subr.mxu0 0.0
    %365 = vmatpush1.msra.mxu0 0.0
    %366 = vmatprep.subr.mxu0 0.0
    %367 = vmatpush1.msra.mxu0 0.0
    %368 = vmatprep.subr.mxu0 0.0
    %369 = vmatpush1.msra.mxu0 0.0
    %370 = vmatprep.subr.mxu0 0.0
    %371 = vmatpush1.msra.mxu0 0.0
    %372 = vmatprep.subr.mxu0 0.0
    %373 = vmatpush1.msra.mxu0 0.0
    %374 = vmatprep.subr.mxu0 0.0
    %375 = vmatpush1.msra.mxu0 0.0
    %376 = vmatprep.subr.mxu0 0.0
    %377 = vmatpush1.msra.mxu0 0.0
    %378 = vmatprep.subr.mxu0 0.0
    %379 = vmatpush1.msra.mxu0 0.0
    %380 = vmatprep.subr.mxu0 %v314
    %381 = vmatpush1.msra.mxu0 %v313
    %382 = vmatprep.subr.mxu0 %v310
    %383 = vmatpush1.msra.mxu0 %v309
    %384 = vmatprep.subr.mxu0 %v306
    %385 = vmatpush1.msra.mxu0 %v305
    %386 = vmatprep.subr.mxu0 %v302
    %387 = vmatpush1.msra.mxu0 %v301
    %388 = vmatprep.subr.mxu0 %v298
    %389 = vmatpush1.msra.mxu0 %v297
    %390 = vmatprep.subr.mxu0 %v294
    %391 = vmatpush1.msra.mxu0 %v293
    %392 = vmatprep.subr.mxu0 %v290
    %393 = vmatpush1.msra.mxu0 %v289
    %394 = vmatprep.subr.mxu0 %v286
    %395 = vmatpush1.msra.mxu0 %v285
    %396 = vmatprep.subr.mxu0 0.0
    %397 = vmatpush2.msra.mxu0 0.0
    %398 = vmatprep.subr.mxu0 0.0
    %399 = vmatpush2.msra.mxu0 0.0
    %400 = vmatprep.subr.mxu0 0.0
    %401 = vmatpush2.msra.mxu0 0.0
    %402 = vmatprep.subr.mxu0 0.0
    %403 = vmatpush2.msra.mxu0 0.0
    %404 = vmatprep.subr.mxu0 0.0
    %405 = vmatpush2.msra.mxu0 0.0
    %406 = vmatprep.subr.mxu0 0.0
    %407 = vmatpush2.msra.mxu0 0.0
    %408 = vmatprep.subr.mxu0 0.0
    %409 = vmatpush2.msra.mxu0 0.0
    %410 = vmatprep.subr.mxu0 0.0
    %411 = vmatpush2.msra.mxu0 0.0
    %412 = vmatprep.subr.mxu0 0.0
    %413 = vmatpush2.msra.mxu0 0.0
    %414 = vmatprep.subr.mxu0 0.0
    %415 = vmatpush2.msra.mxu0 0.0
    %416 = vmatprep.subr.mxu0 0.0
    %417 = vmatpush2.msra.mxu0 0.0
    %418 = vmatprep.subr.mxu0 0.0
    %419 = vmatpush2.msra.mxu0 0.0
    %420 = vmatprep.subr.mxu0 0.0
    %421 = vmatpush2.msra.mxu0 0.0
    %422 = vmatprep.subr.mxu0 0.0
    %423 = vmatpush2.msra.mxu0 0.0
    %424 = vmatprep.subr.mxu0 0.0
    %425 = vmatpush2.msra.mxu0 0.0
    %426 = vmatprep.subr.mxu0 0.0
    %427 = vmatpush2.msra.mxu0 0.0
    %428 = vmatprep.mubr.f32.mxu0 0.0
    %429 = vmatmul.mubr.f32.gmra.mxu0 %v341
    %v430 = vpop.f32.mrf.mxu0
    %v431 = vadd.f32 %v322, %v430
    %v432 = vpop.f32.mrf.mxu0
    %v433 = vadd.f32 %v326, %v432
    %434 = vmatprep.mubr.f32.mxu0 0.0
    %435 = vmatmul.mubr.f32.gmra.mxu0 %v344
    %v436 = vpop.f32.mrf.mxu0
    %v437 = vadd.f32 %v322, %v436
    %v438 = vpop.f32.mrf.mxu0
    %v439 = vadd.f32 %v326, %v438
    %440 = vmatprep.mubr.f32.mxu0 0.0
    %441 = vmatmul.mubr.f32.gmra.mxu0 %v347
    %v442 = vpop.f32.mrf.mxu0
    %v443 = vadd.f32 %v322, %v442
    %v444 = vpop.f32.mrf.mxu0
    %v445 = vadd.f32 %v326, %v444
    %446 = vmatprep.mubr.f32.mxu0 0.0
    %447 = vmatmul.mubr.f32.gmra.mxu0 %v350
    %v448 = vpop.f32.mrf.mxu0
    %v449 = vadd.f32 %v322, %v448
    %v450 = vpop.f32.mrf.mxu0
    %v451 = vadd.f32 %v326, %v450
    %452 = vmatprep.mubr.f32.mxu0 0.0
    %453 = vmatmul.mubr.f32.gmra.mxu0 %v353
    %v454 = vpop.f32.mrf.mxu0
    %v455 = vadd.f32 %v322, %v454
    %v456 = vpop.f32.mrf.mxu0
    %v457 = vadd.f32 %v326, %v456
    %458 = vmatprep.mubr.f32.mxu0 0.0
    %459 = vmatmul.mubr.f32.gmra.mxu0 %v356
    %v460 = vpop.f32.mrf.mxu0
    %v461 = vadd.f32 %v322, %v460
    %v462 = vpop.f32.mrf.mxu0
    %v463 = vadd.f32 %v326, %v462
    %464 = vmatprep.mubr.f32.mxu0 0.0
    %465 = vmatmul.mubr.f32.gmra.mxu0 %v359
    %v466 = vpop.f32.mrf.mxu0
    %v467 = vadd.f32 %v322, %v466
    %v468 = vpop.f32.mrf.mxu0
    %v469 = vadd.f32 %v326, %v468
    %470 = vmatprep.mubr.f32.mxu0 0.0
    %471 = vmatmul.mubr.f32.gmra.mxu0 %v362
    %v472 = vpop.f32.mrf.mxu0
    %v473 = vadd.f32 %v322, %v472
    %v474 = vpop.f32.mrf.mxu0
    %v475 = vadd.f32 %v326, %v474
    %476 = vdwg.mxu0
    %477 = vmatprep.subr.mxu0 0.0
    %478 = vmatpush1.msra.mxu0 0.0
    %479 = vmatprep.subr.mxu0 0.0
    %480 = vmatpush1.msra.mxu0 0.0
    %481 = vmatprep.subr.mxu0 0.0
    %482 = vmatpush1.msra.mxu0 0.0
    %483 = vmatprep.subr.mxu0 0.0
    %484 = vmatpush1.msra.mxu0 0.0
    %485 = vmatprep.subr.mxu0 0.0
    %486 = vmatpush1.msra.mxu0 0.0
    %487 = vmatprep.subr.mxu0 0.0
    %488 = vmatpush1.msra.mxu0 0.0
    %489 = vmatprep.subr.mxu0 0.0
    %490 = vmatpush1.msra.mxu0 0.0
    %491 = vmatprep.subr.mxu0 0.0
    %492 = vmatpush1.msra.mxu0 0.0
    %493 = vmatprep.subr.mxu0 %v316
    %494 = vmatpush1.msra.mxu0 %v315
    %495 = vmatprep.subr.mxu0 %v312
    %496 = vmatpush1.msra.mxu0 %v311
    %497 = vmatprep.subr.mxu0 %v308
    %498 = vmatpush1.msra.mxu0 %v307
    %499 = vmatprep.subr.mxu0 %v304
    %500 = vmatpush1.msra.mxu0 %v303
    %501 = vmatprep.subr.mxu0 %v300
    %502 = vmatpush1.msra.mxu0 %v299
    %503 = vmatprep.subr.mxu0 %v296
    %504 = vmatpush1.msra.mxu0 %v295
    %505 = vmatprep.subr.mxu0 %v292
    %506 = vmatpush1.msra.mxu0 %v291
    %507 = vmatprep.subr.mxu0 %v288
    %508 = vmatpush1.msra.mxu0 %v287
    %509 = vmatprep.subr.mxu0 0.0
    %510 = vmatpush2.msra.mxu0 0.0
    %511 = vmatprep.subr.mxu0 0.0
    %512 = vmatpush2.msra.mxu0 0.0
    %513 = vmatprep.subr.mxu0 0.0
    %514 = vmatpush2.msra.mxu0 0.0
    %515 = vmatprep.subr.mxu0 0.0
    %516 = vmatpush2.msra.mxu0 0.0
    %517 = vmatprep.subr.mxu0 0.0
    %518 = vmatpush2.msra.mxu0 0.0
    %519 = vmatprep.subr.mxu0 0.0
    %520 = vmatpush2.msra.mxu0 0.0
    %521 = vmatprep.subr.mxu0 0.0
    %522 = vmatpush2.msra.mxu0 0.0
    %523 = vmatprep.subr.mxu0 0.0
    %524 = vmatpush2.msra.mxu0 0.0
    %525 = vmatprep.subr.mxu0 0.0
    %526 = vmatpush2.msra.mxu0 0.0
    %527 = vmatprep.subr.mxu0 0.0
    %528 = vmatpush2.msra.mxu0 0.0
    %529 = vmatprep.subr.mxu0 0.0
    %530 = vmatpush2.msra.mxu0 0.0
    %531 = vmatprep.subr.mxu0 0.0
    %532 = vmatpush2.msra.mxu0 0.0
    %533 = vmatprep.subr.mxu0 0.0
    %534 = vmatpush2.msra.mxu0 0.0
    %535 = vmatprep.subr.mxu0 0.0
    %536 = vmatpush2.msra.mxu0 0.0
    %537 = vmatprep.subr.mxu0 0.0
    %538 = vmatpush2.msra.mxu0 0.0
    %539 = vmatprep.subr.mxu0 0.0
    %540 = vmatpush2.msra.mxu0 0.0
    %541 = vmatprep.mubr.f32.mxu0 0.0
    %542 = vmatmul.mubr.f32.gmra.mxu0 %v341
    %v543 = vpop.f32.mrf.mxu0
    %v544 = vadd.f32 %v330, %v543
    %v545 = vpop.f32.mrf.mxu0
    %v546 = vadd.f32 %v334, %v545
    %547 = vmatprep.mubr.f32.mxu0 0.0
    %548 = vmatmul.mubr.f32.gmra.mxu0 %v344
    %v549 = vpop.f32.mrf.mxu0
    %v550 = vadd.f32 %v330, %v549
    %v551 = vpop.f32.mrf.mxu0
    %v552 = vadd.f32 %v334, %v551
    %553 = vmatprep.mubr.f32.mxu0 0.0
    %554 = vmatmul.mubr.f32.gmra.mxu0 %v347
    %v555 = vpop.f32.mrf.mxu0
    %v556 = vadd.f32 %v330, %v555
    %v557 = vpop.f32.mrf.mxu0
    %v558 = vadd.f32 %v334, %v557
    %559 = vmatprep.mubr.f32.mxu0 0.0
    %560 = vmatmul.mubr.f32.gmra.mxu0 %v350
    %v561 = vpop.f32.mrf.mxu0
    %v562 = vadd.f32 %v330, %v561
    %v563 = vpop.f32.mrf.mxu0
    %v564 = vadd.f32 %v334, %v563
    %565 = vmatprep.mubr.f32.mxu0 0.0
    %566 = vmatmul.mubr.f32.gmra.mxu0 %v353
    %v567 = vpop.f32.mrf.mxu0
    %v568 = vadd.f32 %v330, %v567
    %v569 = vpop.f32.mrf.mxu0
    %v570 = vadd.f32 %v334, %v569
    %571 = vmatprep.mubr.f32.mxu0 0.0
    %572 = vmatmul.mubr.f32.gmra.mxu0 %v356
    %v573 = vpop.f32.mrf.mxu0
    %v574 = vadd.f32 %v330, %v573
    %v575 = vpop.f32.mrf.mxu0
    %v576 = vadd.f32 %v334, %v575
    %577 = vmatprep.mubr.f32.mxu0 0.0
    %578 = vmatmul.mubr.f32.gmra.mxu0 %v359
    %v579 = vpop.f32.mrf.mxu0
    %v580 = vadd.f32 %v330, %v579
    %v581 = vpop.f32.mrf.mxu0
    %v582 = vadd.f32 %v334, %v581
    %583 = vmatprep.mubr.f32.mxu0 0.0
    %584 = vmatmul.mubr.f32.gmra.mxu0 %v362
    %v585 = vpop.f32.mrf.mxu0
    %v586 = vadd.f32 %v330, %v585
    %v587 = vpop.f32.mrf.mxu0
    %v588 = vadd.f32 %v334, %v587
    %589 = vdwg.mxu0
    %v590 = vld [vmem:[%s7] sm:$0xff]
    %v591 = vld [vmem:[%s8] sm:$0xff]
    %v592 = vld [vmem:[#allocation2] sm:$0xff]
    %v593 = vld [vmem:[#allocation2 + $0x8] sm:$0xff]
    %v594 = vld [vmem:[#allocation2 + $0x10] sm:$0xff]
    %v595 = vld [vmem:[#allocation2 + $0x18] sm:$0xff]
    %v596 = vld [vmem:[#allocation2 + $0x20] sm:$0xff]
    %v597 = vld [vmem:[#allocation2 + $0x28] sm:$0xff]
    %v598 = vld [vmem:[#allocation2 + $0x30] sm:$0xff]
    %v599 = vld [vmem:[#allocation2 + $0x38] sm:$0xff]
    %v600 = vld [vmem:[#allocation2 + $0x40] sm:$0xff]
    %v601 = vld [vmem:[#allocation2 + $0x48] sm:$0xff]
    %v602 = vld [vmem:[#allocation2 + $0x50] sm:$0xff]
    %v603 = vld [vmem:[#allocation2 + $0x58] sm:$0xff]
    %v604 = vld [vmem:[#allocation2 + $0x60] sm:$0xff]
    %v605 = vld [vmem:[#allocation2 + $0x68] sm:$0xff]
    %v606 = vld [vmem:[#allocation2 + $0x70] sm:$0xff]
    %v607 = vld [vmem:[#allocation2 + $0x78] sm:$0xff]
    %v608 = vld [vmem:[#allocation2 + $0x80] sm:$0xff]
    %v609 = vld [vmem:[#allocation2 + $0x88] sm:$0xff]
    %v610 = vld [vmem:[#allocation2 + $0x90] sm:$0xff]
    %v611 = vld [vmem:[#allocation2 + $0x98] sm:$0xff]
    %v612 = vld [vmem:[#allocation2 + $0xa0] sm:$0xff]
    %v613 = vld [vmem:[#allocation2 + $0xa8] sm:$0xff]
    %v614 = vld [vmem:[#allocation2 + $0xb0] sm:$0xff]
    %v615 = vld [vmem:[#allocation2 + $0xb8] sm:$0xff]
    %v616 = vld [vmem:[#allocation2 + $0xc0] sm:$0xff]
    %v617 = vld [vmem:[#allocation2 + $0xc8] sm:$0xff]
    %v618 = vld [vmem:[#allocation2 + $0xd0] sm:$0xff]
    %v619 = vld [vmem:[#allocation2 + $0xd8] sm:$0xff]
    %v620 = vld [vmem:[#allocation2 + $0xe0] sm:$0xff]
    %v621 = vld [vmem:[#allocation2 + $0xe8] sm:$0xff]
    %v622 = vld [vmem:[#allocation2 + $0xf0] sm:$0xff]
    %v623 = vld [vmem:[#allocation2 + $0xf8] sm:$0xff]
    %v624 = vld [vmem:[#allocation2 + $0x100] sm:$0xff]
    %v625 = vld [vmem:[#allocation2 + $0x108] sm:$0xff]
    %v626 = vld [vmem:[#allocation2 + $0x110] sm:$0xff]
    %v627 = vld [vmem:[#allocation2 + $0x118] sm:$0xff]
    %v628 = vld [vmem:[#allocation2 + $0x120] sm:$0xff]
    %v629 = vld [vmem:[#allocation2 + $0x128] sm:$0xff]
    %v630 = vld [vmem:[#allocation2 + $0x130] sm:$0xff]
    %v631 = vld [vmem:[#allocation2 + $0x138] sm:$0xff]
    %v632 = vld [vmem:[#allocation2 + $0x140] sm:$0xff]
    %v633 = vld [vmem:[#allocation2 + $0x148] sm:$0xff]
    %v634 = vld [vmem:[#allocation2 + $0x150] sm:$0xff]
    %v635 = vld [vmem:[#allocation2 + $0x158] sm:$0xff]
    %v636 = vld [vmem:[#allocation2 + $0x160] sm:$0xff]
    %v637 = vld [vmem:[#allocation2 + $0x168] sm:$0xff]
    %v638 = vld [vmem:[#allocation2 + $0x170] sm:$0xff]
    %v639 = vld [vmem:[#allocation2 + $0x178] sm:$0xff]
    %v640 = vld [vmem:[#allocation2 + $0x180] sm:$0xff]
    %v641 = vld [vmem:[#allocation2 + $0x188] sm:$0xff]
    %v642 = vld [vmem:[#allocation2 + $0x190] sm:$0xff]
    %v643 = vld [vmem:[#allocation2 + $0x198] sm:$0xff]
    %v644 = vld [vmem:[#allocation2 + $0x1a0] sm:$0xff]
    %v645 = vld [vmem:[#allocation2 + $0x1a8] sm:$0xff]
    %v646 = vld [vmem:[#allocation2 + $0x1b0] sm:$0xff]
    %v647 = vld [vmem:[#allocation2 + $0x1b8] sm:$0xff]
    %v648 = vld [vmem:[#allocation2 + $0x1c0] sm:$0xff]
    %v649 = vld [vmem:[#allocation2 + $0x1c8] sm:$0xff]
    %v650 = vld [vmem:[#allocation2 + $0x1d0] sm:$0xff]
    %v651 = vld [vmem:[#allocation2 + $0x1d8] sm:$0xff]
    %v652 = vld [vmem:[#allocation2 + $0x1e0] sm:$0xff]
    %v653 = vld [vmem:[#allocation2 + $0x1e8] sm:$0xff]
    %v654 = vld [vmem:[#allocation2 + $0x1f0] sm:$0xff]
    %v655 = vld [vmem:[#allocation2 + $0x1f8] sm:$0xff]
    %656 = vmatprep.subr.mxu0 %v653
    %657 = vmatpush1.msra.mxu0 %v652
    %658 = vmatprep.subr.mxu0 %v649
    %659 = vmatpush1.msra.mxu0 %v648
    %660 = vmatprep.subr.mxu0 %v645
    %661 = vmatpush1.msra.mxu0 %v644
    %662 = vmatprep.subr.mxu0 %v641
    %663 = vmatpush1.msra.mxu0 %v640
    %664 = vmatprep.subr.mxu0 %v637
    %665 = vmatpush1.msra.mxu0 %v636
    %666 = vmatprep.subr.mxu0 %v633
    %667 = vmatpush1.msra.mxu0 %v632
    %668 = vmatprep.subr.mxu0 %v629
    %669 = vmatpush1.msra.mxu0 %v628
    %670 = vmatprep.subr.mxu0 %v625
    %671 = vmatpush1.msra.mxu0 %v624
    %672 = vmatprep.subr.mxu0 %v621
    %673 = vmatpush1.msra.mxu0 %v620
    %674 = vmatprep.subr.mxu0 %v617
    %675 = vmatpush1.msra.mxu0 %v616
    %676 = vmatprep.subr.mxu0 %v613
    %677 = vmatpush1.msra.mxu0 %v612
    %678 = vmatprep.subr.mxu0 %v609
    %679 = vmatpush1.msra.mxu0 %v608
    %680 = vmatprep.subr.mxu0 %v605
    %681 = vmatpush1.msra.mxu0 %v604
    %682 = vmatprep.subr.mxu0 %v601
    %683 = vmatpush1.msra.mxu0 %v600
    %684 = vmatprep.subr.mxu0 %v597
    %685 = vmatpush1.msra.mxu0 %v596
    %686 = vmatprep.subr.mxu0 %v593
    %687 = vmatpush1.msra.mxu0 %v592
    %688 = vmatprep.subr.mxu0 0.0
    %689 = vmatpush2.msra.mxu0 0.0
    %690 = vmatprep.subr.mxu0 0.0
    %691 = vmatpush2.msra.mxu0 0.0
    %692 = vmatprep.subr.mxu0 0.0
    %693 = vmatpush2.msra.mxu0 0.0
    %694 = vmatprep.subr.mxu0 0.0
    %695 = vmatpush2.msra.mxu0 0.0
    %696 = vmatprep.subr.mxu0 0.0
    %697 = vmatpush2.msra.mxu0 0.0
    %698 = vmatprep.subr.mxu0 0.0
    %699 = vmatpush2.msra.mxu0 0.0
    %700 = vmatprep.subr.mxu0 0.0
    %701 = vmatpush2.msra.mxu0 0.0
    %702 = vmatprep.subr.mxu0 0.0
    %703 = vmatpush2.msra.mxu0 0.0
    %704 = vmatprep.subr.mxu0 0.0
    %705 = vmatpush2.msra.mxu0 0.0
    %706 = vmatprep.subr.mxu0 0.0
    %707 = vmatpush2.msra.mxu0 0.0
    %708 = vmatprep.subr.mxu0 0.0
    %709 = vmatpush2.msra.mxu0 0.0
    %710 = vmatprep.subr.mxu0 0.0
    %711 = vmatpush2.msra.mxu0 0.0
    %712 = vmatprep.subr.mxu0 0.0
    %713 = vmatpush2.msra.mxu0 0.0
    %714 = vmatprep.subr.mxu0 0.0
    %715 = vmatpush2.msra.mxu0 0.0
    %716 = vmatprep.subr.mxu0 0.0
    %717 = vmatpush2.msra.mxu0 0.0
    %718 = vmatprep.subr.mxu0 0.0
    %719 = vmatpush2.msra.mxu0 0.0
    %720 = vmatprep.mubr.f32.mxu0 0.0
    %721 = vmatmul.mubr.f32.gmra.mxu0 %v590
    %v722 = vpop.f32.mrf.mxu0
    %v723 = vadd.f32 0.0, %v722
    %v724 = vpop.f32.mrf.mxu0
    %v725 = vadd.f32 0.0, %v724
    %726 = vdwg.mxu0
    %727 = vmatprep.subr.mxu0 %v655
    %728 = vmatpush1.msra.mxu0 %v654
    %729 = vmatprep.subr.mxu0 %v651
    %730 = vmatpush1.msra.mxu0 %v650
    %731 = vmatprep.subr.mxu0 %v647
    %732 = vmatpush1.msra.mxu0 %v646
    %733 = vmatprep.subr.mxu0 %v643
    %734 = vmatpush1.msra.mxu0 %v642
    %735 = vmatprep.subr.mxu0 %v639
    %736 = vmatpush1.msra.mxu0 %v638
    %737 = vmatprep.subr.mxu0 %v635
    %738 = vmatpush1.msra.mxu0 %v634
    %739 = vmatprep.subr.mxu0 %v631
    %740 = vmatpush1.msra.mxu0 %v630
    %741 = vmatprep.subr.mxu0 %v627
    %742 = vmatpush1.msra.mxu0 %v626
    %743 = vmatprep.subr.mxu0 %v623
    %744 = vmatpush1.msra.mxu0 %v622
    %745 = vmatprep.subr.mxu0 %v619
    %746 = vmatpush1.msra.mxu0 %v618
    %747 = vmatprep.subr.mxu0 %v615
    %748 = vmatpush1.msra.mxu0 %v614
    %749 = vmatprep.subr.mxu0 %v611
    %750 = vmatpush1.msra.mxu0 %v610
    %751 = vmatprep.subr.mxu0 %v607
    %752 = vmatpush1.msra.mxu0 %v606
    %753 = vmatprep.subr.mxu0 %v603
    %754 = vmatpush1.msra.mxu0 %v602
    %755 = vmatprep.subr.mxu0 %v599
    %756 = vmatpush1.msra.mxu0 %v598
    %757 = vmatprep.subr.mxu0 %v595
    %758 = vmatpush1.msra.mxu0 %v594
    %759 = vmatprep.subr.mxu0 0.0
    %760 = vmatpush2.msra.mxu0 0.0
    %761 = vmatprep.subr.mxu0 0.0
    %762 = vmatpush2.msra.mxu0 0.0
    %763 = vmatprep.subr.mxu0 0.0
    %764 = vmatpush2.msra.mxu0 0.0
    %765 = vmatprep.subr.mxu0 0.0
    %766 = vmatpush2.msra.mxu0 0.0
    %767 = vmatprep.subr.mxu0 0.0
    %768 = vmatpush2.msra.mxu0 0.0
    %769 = vmatprep.subr.mxu0 0.0
    %770 = vmatpush2.msra.mxu0 0.0
    %771 = vmatprep.subr.mxu0 0.0
    %772 = vmatpush2.msra.mxu0 0.0
    %773 = vmatprep.subr.mxu0 0.0
    %774 = vmatpush2.msra.mxu0 0.0
    %775 = vmatprep.subr.mxu0 0.0
    %776 = vmatpush2.msra.mxu0 0.0
    %777 = vmatprep.subr.mxu0 0.0
    %778 = vmatpush2.msra.mxu0 0.0
    %779 = vmatprep.subr.mxu0 0.0
    %780 = vmatpush2.msra.mxu0 0.0
    %781 = vmatprep.subr.mxu0 0.0
    %782 = vmatpush2.msra.mxu0 0.0
    %783 = vmatprep.subr.mxu0 0.0
    %784 = vmatpush2.msra.mxu0 0.0
    %785 = vmatprep.subr.mxu0 0.0
    %786 = vmatpush2.msra.mxu0 0.0
    %787 = vmatprep.subr.mxu0 0.0
    %788 = vmatpush2.msra.mxu0 0.0
    %789 = vmatprep.subr.mxu0 0.0
    %790 = vmatpush2.msra.mxu0 0.0
    %791 = vmatprep.mubr.f32.mxu0 0.0
    %792 = vmatmul.mubr.f32.gmra.mxu0 %v590
    %v793 = vpop.f32.mrf.mxu0
    %v794 = vadd.f32 0.0, %v793
    %v795 = vpop.f32.mrf.mxu0
    %v796 = vadd.f32 0.0, %v795
    %797 = vdwg.mxu0
    %v798 = vadd.f32 %v431, %v723
    %v799 = vadd.f32 %v433, %v725
    %v800 = vadd.f32 %v544, %v794
    %v801 = vadd.f32 %v546, %v796
    %v802 = vxor.u32 %v798, 2147483648
    %v803 = vxor.u32 %v799, 2147483648
    %v804 = vxor.u32 %v800, 2147483648
    %v805 = vmul.f32 %v802, 1.442695
    %v806 = vpow.pop %v805
    %v807 = vmul.f32 %v803, 1.442695
    %v808 = vpow.pop %v807
    %v809 = vmul.f32 %v804, 1.442695
    %v810 = vpow.pop %v809
    %v811 = vadd.f32 %v806, 1.0
    %v812 = vadd.f32 %v808, 1.0
    %v813 = vadd.f32 %v810, 1.0
    %v814 = vrcp.pop %v811
    %v815 = vmul.f32 1.0, %v814
    %v816 = vrcp.pop %v812
    %v817 = vmul.f32 1.0, %v816
    %v818 = vrcp.pop %v813
    %v819 = vmul.f32 1.0, %v818
    %v820 = vtanh.pop %v801
    %v821 = vmul.f32 %v817, %v591
    %v822 = vmul.f32 %v815, %v820
    %v823 = vadd.f32 %v821, %v822
    %v824 = vtanh.pop %v823
    %v825 = vmul.f32 %v819, %v824
    %826 = vmatprep.subr.mxu0 %v653
    %827 = vmatpush1.msra.mxu0 %v652
    %828 = vmatprep.subr.mxu0 %v649
    %829 = vmatpush1.msra.mxu0 %v648
    %830 = vmatprep.subr.mxu0 %v645
    %831 = vmatpush1.msra.mxu0 %v644
    %832 = vmatprep.subr.mxu0 %v641
    %833 = vmatpush1.msra.mxu0 %v640
    %834 = vmatprep.subr.mxu0 %v637
    %835 = vmatpush1.msra.mxu0 %v636
    %836 = vmatprep.subr.mxu0 %v633
    %837 = vmatpush1.msra.mxu0 %v632
    %838 = vmatprep.subr.mxu0 %v629
    %839 = vmatpush1.msra.mxu0 %v628
    %840 = vmatprep.subr.mxu0 %v625
    %841 = vmatpush1.msra.mxu0 %v624
    %842 = vmatprep.subr.mxu0 %v621
    %843 = vmatpush1.msra.mxu0 %v620
    %844 = vmatprep.subr.mxu0 %v617
    %845 = vmatpush1.msra.mxu0 %v616
    %846 = vmatprep.subr.mxu0 %v613
    %847 = vmatpush1.msra.mxu0 %v612
    %848 = vmatprep.subr.mxu0 %v609
    %849 = vmatpush1.msra.mxu0 %v608
    %850 = vmatprep.subr.mxu0 %v605
    %851 = vmatpush1.msra.mxu0 %v604
    %852 = vmatprep.subr.mxu0 %v601
    %853 = vmatpush1.msra.mxu0 %v600
    %854 = vmatprep.subr.mxu0 %v597
    %855 = vmatpush1.msra.mxu0 %v596
    %856 = vmatprep.subr.mxu0 %v593
    %857 = vmatpush1.msra.mxu0 %v592
    %858 = vmatprep.subr.mxu0 0.0
    %859 = vmatpush2.msra.mxu0 0.0
    %860 = vmatprep.subr.mxu0 0.0
    %861 = vmatpush2.msra.mxu0 0.0
    %862 = vmatprep.subr.mxu0 0.0
    %863 = vmatpush2.msra.mxu0 0.0
    %864 = vmatprep.subr.mxu0 0.0
    %865 = vmatpush2.msra.mxu0 0.0
    %866 = vmatprep.subr.mxu0 0.0
    %867 = vmatpush2.msra.mxu0 0.0
    %868 = vmatprep.subr.mxu0 0.0
    %869 = vmatpush2.msra.mxu0 0.0
    %870 = vmatprep.subr.mxu0 0.0
    %871 = vmatpush2.msra.mxu0 0.0
    %872 = vmatprep.subr.mxu0 0.0
    %873 = vmatpush2.msra.mxu0 0.0
    %874 = vmatprep.subr.mxu0 0.0
    %875 = vmatpush2.msra.mxu0 0.0
    %876 = vmatprep.subr.mxu0 0.0
    %877 = vmatpush2.msra.mxu0 0.0
    %878 = vmatprep.subr.mxu0 0.0
    %879 = vmatpush2.msra.mxu0 0.0
    %880 = vmatprep.subr.mxu0 0.0
    %881 = vmatpush2.msra.mxu0 0.0
    %882 = vmatprep.subr.mxu0 0.0
    %883 = vmatpush2.msra.mxu0 0.0
    %884 = vmatprep.subr.mxu0 0.0
    %885 = vmatpush2.msra.mxu0 0.0
    %886 = vmatprep.subr.mxu0 0.0
    %887 = vmatpush2.msra.mxu0 0.0
    %888 = vmatprep.subr.mxu0 0.0
    %889 = vmatpush2.msra.mxu0 0.0
    %890 = vmatprep.mubr.f32.mxu0 0.0
    %891 = vmatmul.mubr.f32.gmra.mxu0 %v825
    %v892 = vpop.f32.mrf.mxu0
    %v893 = vadd.f32 0.0, %v892
    %v894 = vpop.f32.mrf.mxu0
    %v895 = vadd.f32 0.0, %v894
    %896 = vdwg.mxu0
    %897 = vmatprep.subr.mxu0 %v655
    %898 = vmatpush1.msra.mxu0 %v654
    %899 = vmatprep.subr.mxu0 %v651
    %900 = vmatpush1.msra.mxu0 %v650
    %901 = vmatprep.subr.mxu0 %v647
    %902 = vmatpush1.msra.mxu0 %v646
    %903 = vmatprep.subr.mxu0 %v643
    %904 = vmatpush1.msra.mxu0 %v642
    %905 = vmatprep.subr.mxu0 %v639
    %906 = vmatpush1.msra.mxu0 %v638
    %907 = vmatprep.subr.mxu0 %v635
    %908 = vmatpush1.msra.mxu0 %v634
    %909 = vmatprep.subr.mxu0 %v631
    %910 = vmatpush1.msra.mxu0 %v630
    %911 = vmatprep.subr.mxu0 %v627
    %912 = vmatpush1.msra.mxu0 %v626
    %913 = vmatprep.subr.mxu0 %v623
    %914 = vmatpush1.msra.mxu0 %v622
    %915 = vmatprep.subr.mxu0 %v619
    %916 = vmatpush1.msra.mxu0 %v618
    %917 = vmatprep.subr.mxu0 %v615
    %918 = vmatpush1.msra.mxu0 %v614
    %919 = vmatprep.subr.mxu0 %v611
    %920 = vmatpush1.msra.mxu0 %v610
    %921 = vmatprep.subr.mxu0 %v607
    %922 = vmatpush1.msra.mxu0 %v606
    %923 = vmatprep.subr.mxu0 %v603
    %924 = vmatpush1.msra.mxu0 %v602
    %925 = vmatprep.subr.mxu0 %v599
    %926 = vmatpush1.msra.mxu0 %v598
    %927 = vmatprep.subr.mxu0 %v595
    %928 = vmatpush1.msra.mxu0 %v594
    %929 = vmatprep.subr.mxu0 0.0
    %930 = vmatpush2.msra.mxu0 0.0
    %931 = vmatprep.subr.mxu0 0.0
    %932 = vmatpush2.msra.mxu0 0.0
    %933 = vmatprep.subr.mxu0 0.0
    %934 = vmatpush2.msra.mxu0 0.0
    %935 = vmatprep.subr.mxu0 0.0
    %936 = vmatpush2.msra.mxu0 0.0
    %937 = vmatprep.subr.mxu0 0.0
    %938 = vmatpush2.msra.mxu0 0.0
    %939 = vmatprep.subr.mxu0 0.0
    %940 = vmatpush2.msra.mxu0 0.0
    %941 = vmatprep.subr.mxu0 0.0
    %942 = vmatpush2.msra.mxu0 0.0
    %943 = vmatprep.subr.mxu0 0.0
    %944 = vmatpush2.msra.mxu0 0.0
    %945 = vmatprep.subr.mxu0 0.0
    %946 = vmatpush2.msra.mxu0 0.0
    %947 = vmatprep.subr.mxu0 0.0
    %948 = vmatpush2.msra.mxu0 0.0
    %949 = vmatprep.subr.mxu0 0.0
    %950 = vmatpush2.msra.mxu0 0.0
    %951 = vmatprep.subr.mxu0 0.0
    %952 = vmatpush2.msra.mxu0 0.0
    %953 = vmatprep.subr.mxu0 0.0
    %954 = vmatpush2.msra.mxu0 0.0
    %955 = vmatprep.subr.mxu0 0.0
    %956 = vmatpush2.msra.mxu0 0.0
    %957 = vmatprep.subr.mxu0 0.0
    %958 = vmatpush2.msra.mxu0 0.0
    %959 = vmatprep.subr.mxu0 0.0
    %960 = vmatpush2.msra.mxu0 0.0
    %961 = vmatprep.mubr.f32.mxu0 0.0
    %962 = vmatmul.mubr.f32.gmra.mxu0 %v825
    %v963 = vpop.f32.mrf.mxu0
    %v964 = vadd.f32 0.0, %v963
    %v965 = vpop.f32.mrf.mxu0
    %v966 = vadd.f32 0.0, %v965
    %967 = vdwg.mxu0
    %v968 = vadd.f32 %v437, %v893
    %v969 = vadd.f32 %v439, %v895
    %v970 = vadd.f32 %v550, %v964
    %v971 = vadd.f32 %v552, %v966
    %v972 = vxor.u32 %v968, 2147483648
    %v973 = vxor.u32 %v969, 2147483648
    %v974 = vxor.u32 %v970, 2147483648
    %v975 = vmul.f32 %v972, 1.442695
    %v976 = vpow.pop %v975
    %v977 = vmul.f32 %v973, 1.442695
    %v978 = vpow.pop %v977
    %v979 = vmul.f32 %v974, 1.442695
    %v980 = vpow.pop %v979
    %v981 = vadd.f32 %v976, 1.0
    %v982 = vadd.f32 %v978, 1.0
    %v983 = vadd.f32 %v980, 1.0
    %v984 = vrcp.pop %v981
    %v985 = vmul.f32 1.0, %v984
    %v986 = vrcp.pop %v982
    %v987 = vmul.f32 1.0, %v986
    %v988 = vrcp.pop %v983
    %v989 = vmul.f32 1.0, %v988
    %v990 = vtanh.pop %v971
    %v991 = vmul.f32 %v987, %v823
    %v992 = vmul.f32 %v985, %v990
    %v993 = vadd.f32 %v991, %v992
    %v994 = vtanh.pop %v993
    %v995 = vmul.f32 %v989, %v994
    %996 = vmatprep.subr.mxu0 %v653
    %997 = vmatpush1.msra.mxu0 %v652
    %998 = vmatprep.subr.mxu0 %v649
    %999 = vmatpush1.msra.mxu0 %v648
    %1000 = vmatprep.subr.mxu0 %v645
    %1001 = vmatpush1.msra.mxu0 %v644
    %1002 = vmatprep.subr.mxu0 %v641
    %1003 = vmatpush1.msra.mxu0 %v640
    %1004 = vmatprep.subr.mxu0 %v637
    %1005 = vmatpush1.msra.mxu0 %v636
    %1006 = vmatprep.subr.mxu0 %v633
    %1007 = vmatpush1.msra.mxu0 %v632
    %1008 = vmatprep.subr.mxu0 %v629
    %1009 = vmatpush1.msra.mxu0 %v628
    %1010 = vmatprep.subr.mxu0 %v625
    %1011 = vmatpush1.msra.mxu0 %v624
    %1012 = vmatprep.subr.mxu0 %v621
    %1013 = vmatpush1.msra.mxu0 %v620
    %1014 = vmatprep.subr.mxu0 %v617
    %1015 = vmatpush1.msra.mxu0 %v616
    %1016 = vmatprep.subr.mxu0 %v613
    %1017 = vmatpush1.msra.mxu0 %v612
    %1018 = vmatprep.subr.mxu0 %v609
    %1019 = vmatpush1.msra.mxu0 %v608
    %1020 = vmatprep.subr.mxu0 %v605
    %1021 = vmatpush1.msra.mxu0 %v604
    %1022 = vmatprep.subr.mxu0 %v601
    %1023 = vmatpush1.msra.mxu0 %v600
    %1024 = vmatprep.subr.mxu0 %v597
    %1025 = vmatpush1.msra.mxu0 %v596
    %1026 = vmatprep.subr.mxu0 %v593
    %1027 = vmatpush1.msra.mxu0 %v592
    %1028 = vmatprep.subr.mxu0 0.0
    %1029 = vmatpush2.msra.mxu0 0.0
    %1030 = vmatprep.subr.mxu0 0.0
    %1031 = vmatpush2.msra.mxu0 0.0
    %1032 = vmatprep.subr.mxu0 0.0
    %1033 = vmatpush2.msra.mxu0 0.0
    %1034 = vmatprep.subr.mxu0 0.0
    %1035 = vmatpush2.msra.mxu0 0.0
    %1036 = vmatprep.subr.mxu0 0.0
    %1037 = vmatpush2.msra.mxu0 0.0
    %1038 = vmatprep.subr.mxu0 0.0
    %1039 = vmatpush2.msra.mxu0 0.0
    %1040 = vmatprep.subr.mxu0 0.0
    %1041 = vmatpush2.msra.mxu0 0.0
    %1042 = vmatprep.subr.mxu0 0.0
    %1043 = vmatpush2.msra.mxu0 0.0
    %1044 = vmatprep.subr.mxu0 0.0
    %1045 = vmatpush2.msra.mxu0 0.0
    %1046 = vmatprep.subr.mxu0 0.0
    %1047 = vmatpush2.msra.mxu0 0.0
    %1048 = vmatprep.subr.mxu0 0.0
    %1049 = vmatpush2.msra.mxu0 0.0
    %1050 = vmatprep.subr.mxu0 0.0
    %1051 = vmatpush2.msra.mxu0 0.0
    %1052 = vmatprep.subr.mxu0 0.0
    %1053 = vmatpush2.msra.mxu0 0.0
    %1054 = vmatprep.subr.mxu0 0.0
    %1055 = vmatpush2.msra.mxu0 0.0
    %1056 = vmatprep.subr.mxu0 0.0
    %1057 = vmatpush2.msra.mxu0 0.0
    %1058 = vmatprep.subr.mxu0 0.0
    %1059 = vmatpush2.msra.mxu0 0.0
    %1060 = vmatprep.mubr.f32.mxu0 0.0
    %1061 = vmatmul.mubr.f32.gmra.mxu0 %v995
    %v1062 = vpop.f32.mrf.mxu0
    %v1063 = vadd.f32 0.0, %v1062
    %v1064 = vpop.f32.mrf.mxu0
    %v1065 = vadd.f32 0.0, %v1064
    %1066 = vdwg.mxu0
    %1067 = vmatprep.subr.mxu0 %v655
    %1068 = vmatpush1.msra.mxu0 %v654
    %1069 = vmatprep.subr.mxu0 %v651
    %1070 = vmatpush1.msra.mxu0 %v650
    %1071 = vmatprep.subr.mxu0 %v647
    %1072 = vmatpush1.msra.mxu0 %v646
    %1073 = vmatprep.subr.mxu0 %v643
    %1074 = vmatpush1.msra.mxu0 %v642
    %1075 = vmatprep.subr.mxu0 %v639
    %1076 = vmatpush1.msra.mxu0 %v638
    %1077 = vmatprep.subr.mxu0 %v635
    %1078 = vmatpush1.msra.mxu0 %v634
    %1079 = vmatprep.subr.mxu0 %v631
    %1080 = vmatpush1.msra.mxu0 %v630
    %1081 = vmatprep.subr.mxu0 %v627
    %1082 = vmatpush1.msra.mxu0 %v626
    %1083 = vmatprep.subr.mxu0 %v623
    %1084 = vmatpush1.msra.mxu0 %v622
    %1085 = vmatprep.subr.mxu0 %v619
    %1086 = vmatpush1.msra.mxu0 %v618
    %1087 = vmatprep.subr.mxu0 %v615
    %1088 = vmatpush1.msra.mxu0 %v614
    %1089 = vmatprep.subr.mxu0 %v611
    %1090 = vmatpush1.msra.mxu0 %v610
    %1091 = vmatprep.subr.mxu0 %v607
    %1092 = vmatpush1.msra.mxu0 %v606
    %1093 = vmatprep.subr.mxu0 %v603
    %1094 = vmatpush1.msra.mxu0 %v602
    %1095 = vmatprep.subr.mxu0 %v599
    %1096 = vmatpush1.msra.mxu0 %v598
    %1097 = vmatprep.subr.mxu0 %v595
    %1098 = vmatpush1.msra.mxu0 %v594
    %1099 = vmatprep.subr.mxu0 0.0
    %1100 = vmatpush2.msra.mxu0 0.0
    %1101 = vmatprep.subr.mxu0 0.0
    %1102 = vmatpush2.msra.mxu0 0.0
    %1103 = vmatprep.subr.mxu0 0.0
    %1104 = vmatpush2.msra.mxu0 0.0
    %1105 = vmatprep.subr.mxu0 0.0
    %1106 = vmatpush2.msra.mxu0 0.0
    %1107 = vmatprep.subr.mxu0 0.0
    %1108 = vmatpush2.msra.mxu0 0.0
    %1109 = vmatprep.subr.mxu0 0.0
    %1110 = vmatpush2.msra.mxu0 0.0
    %1111 = vmatprep.subr.mxu0 0.0
    %1112 = vmatpush2.msra.mxu0 0.0
    %1113 = vmatprep.subr.mxu0 0.0
    %1114 = vmatpush2.msra.mxu0 0.0
    %1115 = vmatprep.subr.mxu0 0.0
    %1116 = vmatpush2.msra.mxu0 0.0
    %1117 = vmatprep.subr.mxu0 0.0
    %1118 = vmatpush2.msra.mxu0 0.0
    %1119 = vmatprep.subr.mxu0 0.0
    %1120 = vmatpush2.msra.mxu0 0.0
    %1121 = vmatprep.subr.mxu0 0.0
    %1122 = vmatpush2.msra.mxu0 0.0
    %1123 = vmatprep.subr.mxu0 0.0
    %1124 = vmatpush2.msra.mxu0 0.0
    %1125 = vmatprep.subr.mxu0 0.0
    %1126 = vmatpush2.msra.mxu0 0.0
    %1127 = vmatprep.subr.mxu0 0.0
    %1128 = vmatpush2.msra.mxu0 0.0
    %1129 = vmatprep.subr.mxu0 0.0
    %1130 = vmatpush2.msra.mxu0 0.0
    %1131 = vmatprep.mubr.f32.mxu0 0.0
    %1132 = vmatmul.mubr.f32.gmra.mxu0 %v995
    %v1133 = vpop.f32.mrf.mxu0
    %v1134 = vadd.f32 0.0, %v1133
    %v1135 = vpop.f32.mrf.mxu0
    %v1136 = vadd.f32 0.0, %v1135
    %1137 = vdwg.mxu0
    %v1138 = vadd.f32 %v443, %v1063
    %v1139 = vadd.f32 %v445, %v1065
    %v1140 = vadd.f32 %v556, %v1134
    %v1141 = vadd.f32 %v558, %v1136
    %v1142 = vxor.u32 %v1138, 2147483648
    %v1143 = vxor.u32 %v1139, 2147483648
    %v1144 = vxor.u32 %v1140, 2147483648
    %v1145 = vmul.f32 %v1142, 1.442695
    %v1146 = vpow.pop %v1145
    %v1147 = vmul.f32 %v1143, 1.442695
    %v1148 = vpow.pop %v1147
    %v1149 = vmul.f32 %v1144, 1.442695
    %v1150 = vpow.pop %v1149
    %v1151 = vadd.f32 %v1146, 1.0
    %v1152 = vadd.f32 %v1148, 1.0
    %v1153 = vadd.f32 %v1150, 1.0
    %v1154 = vrcp.pop %v1151
    %v1155 = vmul.f32 1.0, %v1154
    %v1156 = vrcp.pop %v1152
    %v1157 = vmul.f32 1.0, %v1156
    %v1158 = vrcp.pop %v1153
    %v1159 = vmul.f32 1.0, %v1158
    %v1160 = vtanh.pop %v1141
    %v1161 = vmul.f32 %v1157, %v993
    %v1162 = vmul.f32 %v1155, %v1160
    %v1163 = vadd.f32 %v1161, %v1162
    %v1164 = vtanh.pop %v1163
    %v1165 = vmul.f32 %v1159, %v1164
    %1166 = vmatprep.subr.mxu0 %v653
    %1167 = vmatpush1.msra.mxu0 %v652
    %1168 = vmatprep.subr.mxu0 %v649
    %1169 = vmatpush1.msra.mxu0 %v648
    %1170 = vmatprep.subr.mxu0 %v645
    %1171 = vmatpush1.msra.mxu0 %v644
    %1172 = vmatprep.subr.mxu0 %v641
    %1173 = vmatpush1.msra.mxu0 %v640
    %1174 = vmatprep.subr.mxu0 %v637
    %1175 = vmatpush1.msra.mxu0 %v636
    %1176 = vmatprep.subr.mxu0 %v633
    %1177 = vmatpush1.msra.mxu0 %v632
    %1178 = vmatprep.subr.mxu0 %v629
    %1179 = vmatpush1.msra.mxu0 %v628
    %1180 = vmatprep.subr.mxu0 %v625
    %1181 = vmatpush1.msra.mxu0 %v624
    %1182 = vmatprep.subr.mxu0 %v621
    %1183 = vmatpush1.msra.mxu0 %v620
    %1184 = vmatprep.subr.mxu0 %v617
    %1185 = vmatpush1.msra.mxu0 %v616
    %1186 = vmatprep.subr.mxu0 %v613
    %1187 = vmatpush1.msra.mxu0 %v612
    %1188 = vmatprep.subr.mxu0 %v609
    %1189 = vmatpush1.msra.mxu0 %v608
    %1190 = vmatprep.subr.mxu0 %v605
    %1191 = vmatpush1.msra.mxu0 %v604
    %1192 = vmatprep.subr.mxu0 %v601
    %1193 = vmatpush1.msra.mxu0 %v600
    %1194 = vmatprep.subr.mxu0 %v597
    %1195 = vmatpush1.msra.mxu0 %v596
    %1196 = vmatprep.subr.mxu0 %v593
    %1197 = vmatpush1.msra.mxu0 %v592
    %1198 = vmatprep.subr.mxu0 0.0
    %1199 = vmatpush2.msra.mxu0 0.0
    %1200 = vmatprep.subr.mxu0 0.0
    %1201 = vmatpush2.msra.mxu0 0.0
    %1202 = vmatprep.subr.mxu0 0.0
    %1203 = vmatpush2.msra.mxu0 0.0
    %1204 = vmatprep.subr.mxu0 0.0
    %1205 = vmatpush2.msra.mxu0 0.0
    %1206 = vmatprep.subr.mxu0 0.0
    %1207 = vmatpush2.msra.mxu0 0.0
    %1208 = vmatprep.subr.mxu0 0.0
    %1209 = vmatpush2.msra.mxu0 0.0
    %1210 = vmatprep.subr.mxu0 0.0
    %1211 = vmatpush2.msra.mxu0 0.0
    %1212 = vmatprep.subr.mxu0 0.0
    %1213 = vmatpush2.msra.mxu0 0.0
    %1214 = vmatprep.subr.mxu0 0.0
    %1215 = vmatpush2.msra.mxu0 0.0
    %1216 = vmatprep.subr.mxu0 0.0
    %1217 = vmatpush2.msra.mxu0 0.0
    %1218 = vmatprep.subr.mxu0 0.0
    %1219 = vmatpush2.msra.mxu0 0.0
    %1220 = vmatprep.subr.mxu0 0.0
    %1221 = vmatpush2.msra.mxu0 0.0
    %1222 = vmatprep.subr.mxu0 0.0
    %1223 = vmatpush2.msra.mxu0 0.0
    %1224 = vmatprep.subr.mxu0 0.0
    %1225 = vmatpush2.msra.mxu0 0.0
    %1226 = vmatprep.subr.mxu0 0.0
    %1227 = vmatpush2.msra.mxu0 0.0
    %1228 = vmatprep.subr.mxu0 0.0
    %1229 = vmatpush2.msra.mxu0 0.0
    %1230 = vmatprep.mubr.f32.mxu0 0.0
    %1231 = vmatmul.mubr.f32.gmra.mxu0 %v1165
    %v1232 = vpop.f32.mrf.mxu0
    %v1233 = vadd.f32 0.0, %v1232
    %v1234 = vpop.f32.mrf.mxu0
    %v1235 = vadd.f32 0.0, %v1234
    %1236 = vdwg.mxu0
    %1237 = vmatprep.subr.mxu0 %v655
    %1238 = vmatpush1.msra.mxu0 %v654
    %1239 = vmatprep.subr.mxu0 %v651
    %1240 = vmatpush1.msra.mxu0 %v650
    %1241 = vmatprep.subr.mxu0 %v647
    %1242 = vmatpush1.msra.mxu0 %v646
    %1243 = vmatprep.subr.mxu0 %v643
    %1244 = vmatpush1.msra.mxu0 %v642
    %1245 = vmatprep.subr.mxu0 %v639
    %1246 = vmatpush1.msra.mxu0 %v638
    %1247 = vmatprep.subr.mxu0 %v635
    %1248 = vmatpush1.msra.mxu0 %v634
    %1249 = vmatprep.subr.mxu0 %v631
    %1250 = vmatpush1.msra.mxu0 %v630
    %1251 = vmatprep.subr.mxu0 %v627
    %1252 = vmatpush1.msra.mxu0 %v626
    %1253 = vmatprep.subr.mxu0 %v623
    %1254 = vmatpush1.msra.mxu0 %v622
    %1255 = vmatprep.subr.mxu0 %v619
    %1256 = vmatpush1.msra.mxu0 %v618
    %1257 = vmatprep.subr.mxu0 %v615
    %1258 = vmatpush1.msra.mxu0 %v614
    %1259 = vmatprep.subr.mxu0 %v611
    %1260 = vmatpush1.msra.mxu0 %v610
    %1261 = vmatprep.subr.mxu0 %v607
    %1262 = vmatpush1.msra.mxu0 %v606
    %1263 = vmatprep.subr.mxu0 %v603
    %1264 = vmatpush1.msra.mxu0 %v602
    %1265 = vmatprep.subr.mxu0 %v599
    %1266 = vmatpush1.msra.mxu0 %v598
    %1267 = vmatprep.subr.mxu0 %v595
    %1268 = vmatpush1.msra.mxu0 %v594
    %1269 = vmatprep.subr.mxu0 0.0
    %1270 = vmatpush2.msra.mxu0 0.0
    %1271 = vmatprep.subr.mxu0 0.0
    %1272 = vmatpush2.msra.mxu0 0.0
    %1273 = vmatprep.subr.mxu0 0.0
    %1274 = vmatpush2.msra.mxu0 0.0
    %1275 = vmatprep.subr.mxu0 0.0
    %1276 = vmatpush2.msra.mxu0 0.0
    %1277 = vmatprep.subr.mxu0 0.0
    %1278 = vmatpush2.msra.mxu0 0.0
    %1279 = vmatprep.subr.mxu0 0.0
    %1280 = vmatpush2.msra.mxu0 0.0
    %1281 = vmatprep.subr.mxu0 0.0
    %1282 = vmatpush2.msra.mxu0 0.0
    %1283 = vmatprep.subr.mxu0 0.0
    %1284 = vmatpush2.msra.mxu0 0.0
    %1285 = vmatprep.subr.mxu0 0.0
    %1286 = vmatpush2.msra.mxu0 0.0
    %1287 = vmatprep.subr.mxu0 0.0
    %1288 = vmatpush2.msra.mxu0 0.0
    %1289 = vmatprep.subr.mxu0 0.0
    %1290 = vmatpush2.msra.mxu0 0.0
    %1291 = vmatprep.subr.mxu0 0.0
    %1292 = vmatpush2.msra.mxu0 0.0
    %1293 = vmatprep.subr.mxu0 0.0
    %1294 = vmatpush2.msra.mxu0 0.0
    %1295 = vmatprep.subr.mxu0 0.0
    %1296 = vmatpush2.msra.mxu0 0.0
    %1297 = vmatprep.subr.mxu0 0.0
    %1298 = vmatpush2.msra.mxu0 0.0
    %1299 = vmatprep.subr.mxu0 0.0
    %1300 = vmatpush2.msra.mxu0 0.0
    %1301 = vmatprep.mubr.f32.mxu0 0.0
    %1302 = vmatmul.mubr.f32.gmra.mxu0 %v1165
    %v1303 = vpop.f32.mrf.mxu0
    %v1304 = vadd.f32 0.0, %v1303
    %v1305 = vpop.f32.mrf.mxu0
    %v1306 = vadd.f32 0.0, %v1305
    %1307 = vdwg.mxu0
    %v1308 = vadd.f32 %v449, %v1233
    %v1309 = vadd.f32 %v451, %v1235
    %v1310 = vadd.f32 %v562, %v1304
    %v1311 = vadd.f32 %v564, %v1306
    %v1312 = vxor.u32 %v1308, 2147483648
    %v1313 = vxor.u32 %v1309, 2147483648
    %v1314 = vxor.u32 %v1310, 2147483648
    %v1315 = vmul.f32 %v1312, 1.442695
    %v1316 = vpow.pop %v1315
    %v1317 = vmul.f32 %v1313, 1.442695
    %v1318 = vpow.pop %v1317
    %v1319 = vmul.f32 %v1314, 1.442695
    %v1320 = vpow.pop %v1319
    %v1321 = vadd.f32 %v1316, 1.0
    %v1322 = vadd.f32 %v1318, 1.0
    %v1323 = vadd.f32 %v1320, 1.0
    %v1324 = vrcp.pop %v1321
    %v1325 = vmul.f32 1.0, %v1324
    %v1326 = vrcp.pop %v1322
    %v1327 = vmul.f32 1.0, %v1326
    %v1328 = vrcp.pop %v1323
    %v1329 = vmul.f32 1.0, %v1328
    %v1330 = vtanh.pop %v1311
    %v1331 = vmul.f32 %v1327, %v1163
    %v1332 = vmul.f32 %v1325, %v1330
    %v1333 = vadd.f32 %v1331, %v1332
    %v1334 = vtanh.pop %v1333
    %v1335 = vmul.f32 %v1329, %v1334
    %1336 = vmatprep.subr.mxu0 %v653
    %1337 = vmatpush1.msra.mxu0 %v652
    %1338 = vmatprep.subr.mxu0 %v649
    %1339 = vmatpush1.msra.mxu0 %v648
    %1340 = vmatprep.subr.mxu0 %v645
    %1341 = vmatpush1.msra.mxu0 %v644
    %1342 = vmatprep.subr.mxu0 %v641
    %1343 = vmatpush1.msra.mxu0 %v640
    %1344 = vmatprep.subr.mxu0 %v637
    %1345 = vmatpush1.msra.mxu0 %v636
    %1346 = vmatprep.subr.mxu0 %v633
    %1347 = vmatpush1.msra.mxu0 %v632
    %1348 = vmatprep.subr.mxu0 %v629
    %1349 = vmatpush1.msra.mxu0 %v628
    %1350 = vmatprep.subr.mxu0 %v625
    %1351 = vmatpush1.msra.mxu0 %v624
    %1352 = vmatprep.subr.mxu0 %v621
    %1353 = vmatpush1.msra.mxu0 %v620
    %1354 = vmatprep.subr.mxu0 %v617
    %1355 = vmatpush1.msra.mxu0 %v616
    %1356 = vmatprep.subr.mxu0 %v613
    %1357 = vmatpush1.msra.mxu0 %v612
    %1358 = vmatprep.subr.mxu0 %v609
    %1359 = vmatpush1.msra.mxu0 %v608
    %1360 = vmatprep.subr.mxu0 %v605
    %1361 = vmatpush1.msra.mxu0 %v604
    %1362 = vmatprep.subr.mxu0 %v601
    %1363 = vmatpush1.msra.mxu0 %v600
    %1364 = vmatprep.subr.mxu0 %v597
    %1365 = vmatpush1.msra.mxu0 %v596
    %1366 = vmatprep.subr.mxu0 %v593
    %1367 = vmatpush1.msra.mxu0 %v592
    %1368 = vmatprep.subr.mxu0 0.0
    %1369 = vmatpush2.msra.mxu0 0.0
    %1370 = vmatprep.subr.mxu0 0.0
    %1371 = vmatpush2.msra.mxu0 0.0
    %1372 = vmatprep.subr.mxu0 0.0
    %1373 = vmatpush2.msra.mxu0 0.0
    %1374 = vmatprep.subr.mxu0 0.0
    %1375 = vmatpush2.msra.mxu0 0.0
    %1376 = vmatprep.subr.mxu0 0.0
    %1377 = vmatpush2.msra.mxu0 0.0
    %1378 = vmatprep.subr.mxu0 0.0
    %1379 = vmatpush2.msra.mxu0 0.0
    %1380 = vmatprep.subr.mxu0 0.0
    %1381 = vmatpush2.msra.mxu0 0.0
    %1382 = vmatprep.subr.mxu0 0.0
    %1383 = vmatpush2.msra.mxu0 0.0
    %1384 = vmatprep.subr.mxu0 0.0
    %1385 = vmatpush2.msra.mxu0 0.0
    %1386 = vmatprep.subr.mxu0 0.0
    %1387 = vmatpush2.msra.mxu0 0.0
    %1388 = vmatprep.subr.mxu0 0.0
    %1389 = vmatpush2.msra.mxu0 0.0
    %1390 = vmatprep.subr.mxu0 0.0
    %1391 = vmatpush2.msra.mxu0 0.0
    %1392 = vmatprep.subr.mxu0 0.0
    %1393 = vmatpush2.msra.mxu0 0.0
    %1394 = vmatprep.subr.mxu0 0.0
    %1395 = vmatpush2.msra.mxu0 0.0
    %1396 = vmatprep.subr.mxu0 0.0
    %1397 = vmatpush2.msra.mxu0 0.0
    %1398 = vmatprep.subr.mxu0 0.0
    %1399 = vmatpush2.msra.mxu0 0.0
    %1400 = vmatprep.mubr.f32.mxu0 0.0
    %1401 = vmatmul.mubr.f32.gmra.mxu0 %v1335
    %v1402 = vpop.f32.mrf.mxu0
    %v1403 = vadd.f32 0.0, %v1402
    %v1404 = vpop.f32.mrf.mxu0
    %v1405 = vadd.f32 0.0, %v1404
    %1406 = vdwg.mxu0
    %1407 = vmatprep.subr.mxu0 %v655
    %1408 = vmatpush1.msra.mxu0 %v654
    %1409 = vmatprep.subr.mxu0 %v651
    %1410 = vmatpush1.msra.mxu0 %v650
    %1411 = vmatprep.subr.mxu0 %v647
    %1412 = vmatpush1.msra.mxu0 %v646
    %1413 = vmatprep.subr.mxu0 %v643
    %1414 = vmatpush1.msra.mxu0 %v642
    %1415 = vmatprep.subr.mxu0 %v639
    %1416 = vmatpush1.msra.mxu0 %v638
    %1417 = vmatprep.subr.mxu0 %v635
    %1418 = vmatpush1.msra.mxu0 %v634
    %1419 = vmatprep.subr.mxu0 %v631
    %1420 = vmatpush1.msra.mxu0 %v630
    %1421 = vmatprep.subr.mxu0 %v627
    %1422 = vmatpush1.msra.mxu0 %v626
    %1423 = vmatprep.subr.mxu0 %v623
    %1424 = vmatpush1.msra.mxu0 %v622
    %1425 = vmatprep.subr.mxu0 %v619
    %1426 = vmatpush1.msra.mxu0 %v618
    %1427 = vmatprep.subr.mxu0 %v615
    %1428 = vmatpush1.msra.mxu0 %v614
    %1429 = vmatprep.subr.mxu0 %v611
    %1430 = vmatpush1.msra.mxu0 %v610
    %1431 = vmatprep.subr.mxu0 %v607
    %1432 = vmatpush1.msra.mxu0 %v606
    %1433 = vmatprep.subr.mxu0 %v603
    %1434 = vmatpush1.msra.mxu0 %v602
    %1435 = vmatprep.subr.mxu0 %v599
    %1436 = vmatpush1.msra.mxu0 %v598
    %1437 = vmatprep.subr.mxu0 %v595
    %1438 = vmatpush1.msra.mxu0 %v594
    %1439 = vmatprep.subr.mxu0 0.0
    %1440 = vmatpush2.msra.mxu0 0.0
    %1441 = vmatprep.subr.mxu0 0.0
    %1442 = vmatpush2.msra.mxu0 0.0
    %1443 = vmatprep.subr.mxu0 0.0
    %1444 = vmatpush2.msra.mxu0 0.0
    %1445 = vmatprep.subr.mxu0 0.0
    %1446 = vmatpush2.msra.mxu0 0.0
    %1447 = vmatprep.subr.mxu0 0.0
    %1448 = vmatpush2.msra.mxu0 0.0
    %1449 = vmatprep.subr.mxu0 0.0
    %1450 = vmatpush2.msra.mxu0 0.0
    %1451 = vmatprep.subr.mxu0 0.0
    %1452 = vmatpush2.msra.mxu0 0.0
    %1453 = vmatprep.subr.mxu0 0.0
    %1454 = vmatpush2.msra.mxu0 0.0
    %1455 = vmatprep.subr.mxu0 0.0
    %1456 = vmatpush2.msra.mxu0 0.0
    %1457 = vmatprep.subr.mxu0 0.0
    %1458 = vmatpush2.msra.mxu0 0.0
    %1459 = vmatprep.subr.mxu0 0.0
    %1460 = vmatpush2.msra.mxu0 0.0
    %1461 = vmatprep.subr.mxu0 0.0
    %1462 = vmatpush2.msra.mxu0 0.0
    %1463 = vmatprep.subr.mxu0 0.0
    %1464 = vmatpush2.msra.mxu0 0.0
    %1465 = vmatprep.subr.mxu0 0.0
    %1466 = vmatpush2.msra.mxu0 0.0
    %1467 = vmatprep.subr.mxu0 0.0
    %1468 = vmatpush2.msra.mxu0 0.0
    %1469 = vmatprep.subr.mxu0 0.0
    %1470 = vmatpush2.msra.mxu0 0.0
    %1471 = vmatprep.mubr.f32.mxu0 0.0
    %1472 = vmatmul.mubr.f32.gmra.mxu0 %v1335
    %v1473 = vpop.f32.mrf.mxu0
    %v1474 = vadd.f32 0.0, %v1473
    %v1475 = vpop.f32.mrf.mxu0
    %v1476 = vadd.f32 0.0, %v1475
    %1477 = vdwg.mxu0
    %v1478 = vadd.f32 %v455, %v1403
    %v1479 = vadd.f32 %v457, %v1405
    %v1480 = vadd.f32 %v568, %v1474
    %v1481 = vadd.f32 %v570, %v1476
    %v1482 = vxor.u32 %v1478, 2147483648
    %v1483 = vxor.u32 %v1479, 2147483648
    %v1484 = vxor.u32 %v1480, 2147483648
    %v1485 = vmul.f32 %v1482, 1.442695
    %v1486 = vpow.pop %v1485
    %v1487 = vmul.f32 %v1483, 1.442695
    %v1488 = vpow.pop %v1487
    %v1489 = vmul.f32 %v1484, 1.442695
    %v1490 = vpow.pop %v1489
    %v1491 = vadd.f32 %v1486, 1.0
    %v1492 = vadd.f32 %v1488, 1.0
    %v1493 = vadd.f32 %v1490, 1.0
    %v1494 = vrcp.pop %v1491
    %v1495 = vmul.f32 1.0, %v1494
    %v1496 = vrcp.pop %v1492
    %v1497 = vmul.f32 1.0, %v1496
    %v1498 = vrcp.pop %v1493
    %v1499 = vmul.f32 1.0, %v1498
    %v1500 = vtanh.pop %v1481
    %v1501 = vmul.f32 %v1497, %v1333
    %v1502 = vmul.f32 %v1495, %v1500
    %v1503 = vadd.f32 %v1501, %v1502
    %v1504 = vtanh.pop %v1503
    %v1505 = vmul.f32 %v1499, %v1504
    %1506 = vmatprep.subr.mxu0 %v653
    %1507 = vmatpush1.msra.mxu0 %v652
    %1508 = vmatprep.subr.mxu0 %v649
    %1509 = vmatpush1.msra.mxu0 %v648
    %1510 = vmatprep.subr.mxu0 %v645
    %1511 = vmatpush1.msra.mxu0 %v644
    %1512 = vmatprep.subr.mxu0 %v641
    %1513 = vmatpush1.msra.mxu0 %v640
    %1514 = vmatprep.subr.mxu0 %v637
    %1515 = vmatpush1.msra.mxu0 %v636
    %1516 = vmatprep.subr.mxu0 %v633
    %1517 = vmatpush1.msra.mxu0 %v632
    %1518 = vmatprep.subr.mxu0 %v629
    %1519 = vmatpush1.msra.mxu0 %v628
    %1520 = vmatprep.subr.mxu0 %v625
    %1521 = vmatpush1.msra.mxu0 %v624
    %1522 = vmatprep.subr.mxu0 %v621
    %1523 = vmatpush1.msra.mxu0 %v620
    %1524 = vmatprep.subr.mxu0 %v617
    %1525 = vmatpush1.msra.mxu0 %v616
    %1526 = vmatprep.subr.mxu0 %v613
    %1527 = vmatpush1.msra.mxu0 %v612
    %1528 = vmatprep.subr.mxu0 %v609
    %1529 = vmatpush1.msra.mxu0 %v608
    %1530 = vmatprep.subr.mxu0 %v605
    %1531 = vmatpush1.msra.mxu0 %v604
    %1532 = vmatprep.subr.mxu0 %v601
    %1533 = vmatpush1.msra.mxu0 %v600
    %1534 = vmatprep.subr.mxu0 %v597
    %1535 = vmatpush1.msra.mxu0 %v596
    %1536 = vmatprep.subr.mxu0 %v593
    %1537 = vmatpush1.msra.mxu0 %v592
    %1538 = vmatprep.subr.mxu0 0.0
    %1539 = vmatpush2.msra.mxu0 0.0
    %1540 = vmatprep.subr.mxu0 0.0
    %1541 = vmatpush2.msra.mxu0 0.0
    %1542 = vmatprep.subr.mxu0 0.0
    %1543 = vmatpush2.msra.mxu0 0.0
    %1544 = vmatprep.subr.mxu0 0.0
    %1545 = vmatpush2.msra.mxu0 0.0
    %1546 = vmatprep.subr.mxu0 0.0
    %1547 = vmatpush2.msra.mxu0 0.0
    %1548 = vmatprep.subr.mxu0 0.0
    %1549 = vmatpush2.msra.mxu0 0.0
    %1550 = vmatprep.subr.mxu0 0.0
    %1551 = vmatpush2.msra.mxu0 0.0
    %1552 = vmatprep.subr.mxu0 0.0
    %1553 = vmatpush2.msra.mxu0 0.0
    %1554 = vmatprep.subr.mxu0 0.0
    %1555 = vmatpush2.msra.mxu0 0.0
    %1556 = vmatprep.subr.mxu0 0.0
    %1557 = vmatpush2.msra.mxu0 0.0
    %1558 = vmatprep.subr.mxu0 0.0
    %1559 = vmatpush2.msra.mxu0 0.0
    %1560 = vmatprep.subr.mxu0 0.0
    %1561 = vmatpush2.msra.mxu0 0.0
    %1562 = vmatprep.subr.mxu0 0.0
    %1563 = vmatpush2.msra.mxu0 0.0
    %1564 = vmatprep.subr.mxu0 0.0
    %1565 = vmatpush2.msra.mxu0 0.0
    %1566 = vmatprep.subr.mxu0 0.0
    %1567 = vmatpush2.msra.mxu0 0.0
    %1568 = vmatprep.subr.mxu0 0.0
    %1569 = vmatpush2.msra.mxu0 0.0
    %1570 = vmatprep.mubr.f32.mxu0 0.0
    %1571 = vmatmul.mubr.f32.gmra.mxu0 %v1505
    %v1572 = vpop.f32.mrf.mxu0
    %v1573 = vadd.f32 0.0, %v1572
    %v1574 = vpop.f32.mrf.mxu0
    %v1575 = vadd.f32 0.0, %v1574
    %1576 = vdwg.mxu0
    %1577 = vmatprep.subr.mxu0 %v655
    %1578 = vmatpush1.msra.mxu0 %v654
    %1579 = vmatprep.subr.mxu0 %v651
    %1580 = vmatpush1.msra.mxu0 %v650
    %1581 = vmatprep.subr.mxu0 %v647
    %1582 = vmatpush1.msra.mxu0 %v646
    %1583 = vmatprep.subr.mxu0 %v643
    %1584 = vmatpush1.msra.mxu0 %v642
    %1585 = vmatprep.subr.mxu0 %v639
    %1586 = vmatpush1.msra.mxu0 %v638
    %1587 = vmatprep.subr.mxu0 %v635
    %1588 = vmatpush1.msra.mxu0 %v634
    %1589 = vmatprep.subr.mxu0 %v631
    %1590 = vmatpush1.msra.mxu0 %v630
    %1591 = vmatprep.subr.mxu0 %v627
    %1592 = vmatpush1.msra.mxu0 %v626
    %1593 = vmatprep.subr.mxu0 %v623
    %1594 = vmatpush1.msra.mxu0 %v622
    %1595 = vmatprep.subr.mxu0 %v619
    %1596 = vmatpush1.msra.mxu0 %v618
    %1597 = vmatprep.subr.mxu0 %v615
    %1598 = vmatpush1.msra.mxu0 %v614
    %1599 = vmatprep.subr.mxu0 %v611
    %1600 = vmatpush1.msra.mxu0 %v610
    %1601 = vmatprep.subr.mxu0 %v607
    %1602 = vmatpush1.msra.mxu0 %v606
    %1603 = vmatprep.subr.mxu0 %v603
    %1604 = vmatpush1.msra.mxu0 %v602
    %1605 = vmatprep.subr.mxu0 %v599
    %1606 = vmatpush1.msra.mxu0 %v598
    %1607 = vmatprep.subr.mxu0 %v595
    %1608 = vmatpush1.msra.mxu0 %v594
    %1609 = vmatprep.subr.mxu0 0.0
    %1610 = vmatpush2.msra.mxu0 0.0
    %1611 = vmatprep.subr.mxu0 0.0
    %1612 = vmatpush2.msra.mxu0 0.0
    %1613 = vmatprep.subr.mxu0 0.0
    %1614 = vmatpush2.msra.mxu0 0.0
    %1615 = vmatprep.subr.mxu0 0.0
    %1616 = vmatpush2.msra.mxu0 0.0
    %1617 = vmatprep.subr.mxu0 0.0
    %1618 = vmatpush2.msra.mxu0 0.0
    %1619 = vmatprep.subr.mxu0 0.0
    %1620 = vmatpush2.msra.mxu0 0.0
    %1621 = vmatprep.subr.mxu0 0.0
    %1622 = vmatpush2.msra.mxu0 0.0
    %1623 = vmatprep.subr.mxu0 0.0
    %1624 = vmatpush2.msra.mxu0 0.0
    %1625 = vmatprep.subr.mxu0 0.0
    %1626 = vmatpush2.msra.mxu0 0.0
    %1627 = vmatprep.subr.mxu0 0.0
    %1628 = vmatpush2.msra.mxu0 0.0
    %1629 = vmatprep.subr.mxu0 0.0
    %1630 = vmatpush2.msra.mxu0 0.0
    %1631 = vmatprep.subr.mxu0 0.0
    %1632 = vmatpush2.msra.mxu0 0.0
    %1633 = vmatprep.subr.mxu0 0.0
    %1634 = vmatpush2.msra.mxu0 0.0
    %1635 = vmatprep.subr.mxu0 0.0
    %1636 = vmatpush2.msra.mxu0 0.0
    %1637 = vmatprep.subr.mxu0 0.0
    %1638 = vmatpush2.msra.mxu0 0.0
    %1639 = vmatprep.subr.mxu0 0.0
    %1640 = vmatpush2.msra.mxu0 0.0
    %1641 = vmatprep.mubr.f32.mxu0 0.0
    %1642 = vmatmul.mubr.f32.gmra.mxu0 %v1505
    %v1643 = vpop.f32.mrf.mxu0
    %v1644 = vadd.f32 0.0, %v1643
    %v1645 = vpop.f32.mrf.mxu0
    %v1646 = vadd.f32 0.0, %v1645
    %1647 = vdwg.mxu0
    %v1648 = vadd.f32 %v461, %v1573
    %v1649 = vadd.f32 %v463, %v1575
    %v1650 = vadd.f32 %v574, %v1644
    %v1651 = vadd.f32 %v576, %v1646
    %v1652 = vxor.u32 %v1648, 2147483648
    %v1653 = vxor.u32 %v1649, 2147483648
    %v1654 = vxor.u32 %v1650, 2147483648
    %v1655 = vmul.f32 %v1652, 1.442695
    %v1656 = vpow.pop %v1655
    %v1657 = vmul.f32 %v1653, 1.442695
    %v1658 = vpow.pop %v1657
    %v1659 = vmul.f32 %v1654, 1.442695
    %v1660 = vpow.pop %v1659
    %v1661 = vadd.f32 %v1656, 1.0
    %v1662 = vadd.f32 %v1658, 1.0
    %v1663 = vadd.f32 %v1660, 1.0
    %v1664 = vrcp.pop %v1661
    %v1665 = vmul.f32 1.0, %v1664
    %v1666 = vrcp.pop %v1662
    %v1667 = vmul.f32 1.0, %v1666
    %v1668 = vrcp.pop %v1663
    %v1669 = vmul.f32 1.0, %v1668
    %v1670 = vtanh.pop %v1651
    %v1671 = vmul.f32 %v1667, %v1503
    %v1672 = vmul.f32 %v1665, %v1670
    %v1673 = vadd.f32 %v1671, %v1672
    %v1674 = vtanh.pop %v1673
    %v1675 = vmul.f32 %v1669, %v1674
    %1676 = vmatprep.subr.mxu0 %v653
    %1677 = vmatpush1.msra.mxu0 %v652
    %1678 = vmatprep.subr.mxu0 %v649
    %1679 = vmatpush1.msra.mxu0 %v648
    %1680 = vmatprep.subr.mxu0 %v645
    %1681 = vmatpush1.msra.mxu0 %v644
    %1682 = vmatprep.subr.mxu0 %v641
    %1683 = vmatpush1.msra.mxu0 %v640
    %1684 = vmatprep.subr.mxu0 %v637
    %1685 = vmatpush1.msra.mxu0 %v636
    %1686 = vmatprep.subr.mxu0 %v633
    %1687 = vmatpush1.msra.mxu0 %v632
    %1688 = vmatprep.subr.mxu0 %v629
    %1689 = vmatpush1.msra.mxu0 %v628
    %1690 = vmatprep.subr.mxu0 %v625
    %1691 = vmatpush1.msra.mxu0 %v624
    %1692 = vmatprep.subr.mxu0 %v621
    %1693 = vmatpush1.msra.mxu0 %v620
    %1694 = vmatprep.subr.mxu0 %v617
    %1695 = vmatpush1.msra.mxu0 %v616
    %1696 = vmatprep.subr.mxu0 %v613
    %1697 = vmatpush1.msra.mxu0 %v612
    %1698 = vmatprep.subr.mxu0 %v609
    %1699 = vmatpush1.msra.mxu0 %v608
    %1700 = vmatprep.subr.mxu0 %v605
    %1701 = vmatpush1.msra.mxu0 %v604
    %1702 = vmatprep.subr.mxu0 %v601
    %1703 = vmatpush1.msra.mxu0 %v600
    %1704 = vmatprep.subr.mxu0 %v597
    %1705 = vmatpush1.msra.mxu0 %v596
    %1706 = vmatprep.subr.mxu0 %v593
    %1707 = vmatpush1.msra.mxu0 %v592
    %1708 = vmatprep.subr.mxu0 0.0
    %1709 = vmatpush2.msra.mxu0 0.0
    %1710 = vmatprep.subr.mxu0 0.0
    %1711 = vmatpush2.msra.mxu0 0.0
    %1712 = vmatprep.subr.mxu0 0.0
    %1713 = vmatpush2.msra.mxu0 0.0
    %1714 = vmatprep.subr.mxu0 0.0
    %1715 = vmatpush2.msra.mxu0 0.0
    %1716 = vmatprep.subr.mxu0 0.0
    %1717 = vmatpush2.msra.mxu0 0.0
    %1718 = vmatprep.subr.mxu0 0.0
    %1719 = vmatpush2.msra.mxu0 0.0
    %1720 = vmatprep.subr.mxu0 0.0
    %1721 = vmatpush2.msra.mxu0 0.0
    %1722 = vmatprep.subr.mxu0 0.0
    %1723 = vmatpush2.msra.mxu0 0.0
    %1724 = vmatprep.subr.mxu0 0.0
    %1725 = vmatpush2.msra.mxu0 0.0
    %1726 = vmatprep.subr.mxu0 0.0
    %1727 = vmatpush2.msra.mxu0 0.0
    %1728 = vmatprep.subr.mxu0 0.0
    %1729 = vmatpush2.msra.mxu0 0.0
    %1730 = vmatprep.subr.mxu0 0.0
    %1731 = vmatpush2.msra.mxu0 0.0
    %1732 = vmatprep.subr.mxu0 0.0
    %1733 = vmatpush2.msra.mxu0 0.0
    %1734 = vmatprep.subr.mxu0 0.0
    %1735 = vmatpush2.msra.mxu0 0.0
    %1736 = vmatprep.subr.mxu0 0.0
    %1737 = vmatpush2.msra.mxu0 0.0
    %1738 = vmatprep.subr.mxu0 0.0
    %1739 = vmatpush2.msra.mxu0 0.0
    %1740 = vmatprep.mubr.f32.mxu0 0.0
    %1741 = vmatmul.mubr.f32.gmra.mxu0 %v1675
    %v1742 = vpop.f32.mrf.mxu0
    %v1743 = vadd.f32 0.0, %v1742
    %v1744 = vpop.f32.mrf.mxu0
    %v1745 = vadd.f32 0.0, %v1744
    %1746 = vdwg.mxu0
    %1747 = vmatprep.subr.mxu0 %v655
    %1748 = vmatpush1.msra.mxu0 %v654
    %1749 = vmatprep.subr.mxu0 %v651
    %1750 = vmatpush1.msra.mxu0 %v650
    %1751 = vmatprep.subr.mxu0 %v647
    %1752 = vmatpush1.msra.mxu0 %v646
    %1753 = vmatprep.subr.mxu0 %v643
    %1754 = vmatpush1.msra.mxu0 %v642
    %1755 = vmatprep.subr.mxu0 %v639
    %1756 = vmatpush1.msra.mxu0 %v638
    %1757 = vmatprep.subr.mxu0 %v635
    %1758 = vmatpush1.msra.mxu0 %v634
    %1759 = vmatprep.subr.mxu0 %v631
    %1760 = vmatpush1.msra.mxu0 %v630
    %1761 = vmatprep.subr.mxu0 %v627
    %1762 = vmatpush1.msra.mxu0 %v626
    %1763 = vmatprep.subr.mxu0 %v623
    %1764 = vmatpush1.msra.mxu0 %v622
    %1765 = vmatprep.subr.mxu0 %v619
    %1766 = vmatpush1.msra.mxu0 %v618
    %1767 = vmatprep.subr.mxu0 %v615
    %1768 = vmatpush1.msra.mxu0 %v614
    %1769 = vmatprep.subr.mxu0 %v611
    %1770 = vmatpush1.msra.mxu0 %v610
    %1771 = vmatprep.subr.mxu0 %v607
    %1772 = vmatpush1.msra.mxu0 %v606
    %1773 = vmatprep.subr.mxu0 %v603
    %1774 = vmatpush1.msra.mxu0 %v602
    %1775 = vmatprep.subr.mxu0 %v599
    %1776 = vmatpush1.msra.mxu0 %v598
    %1777 = vmatprep.subr.mxu0 %v595
    %1778 = vmatpush1.msra.mxu0 %v594
    %1779 = vmatprep.subr.mxu0 0.0
    %1780 = vmatpush2.msra.mxu0 0.0
    %1781 = vmatprep.subr.mxu0 0.0
    %1782 = vmatpush2.msra.mxu0 0.0
    %1783 = vmatprep.subr.mxu0 0.0
    %1784 = vmatpush2.msra.mxu0 0.0
    %1785 = vmatprep.subr.mxu0 0.0
    %1786 = vmatpush2.msra.mxu0 0.0
    %1787 = vmatprep.subr.mxu0 0.0
    %1788 = vmatpush2.msra.mxu0 0.0
    %1789 = vmatprep.subr.mxu0 0.0
    %1790 = vmatpush2.msra.mxu0 0.0
    %1791 = vmatprep.subr.mxu0 0.0
    %1792 = vmatpush2.msra.mxu0 0.0
    %1793 = vmatprep.subr.mxu0 0.0
    %1794 = vmatpush2.msra.mxu0 0.0
    %1795 = vmatprep.subr.mxu0 0.0
    %1796 = vmatpush2.msra.mxu0 0.0
    %1797 = vmatprep.subr.mxu0 0.0
    %1798 = vmatpush2.msra.mxu0 0.0
    %1799 = vmatprep.subr.mxu0 0.0
    %1800 = vmatpush2.msra.mxu0 0.0
    %1801 = vmatprep.subr.mxu0 0.0
    %1802 = vmatpush2.msra.mxu0 0.0
    %1803 = vmatprep.subr.mxu0 0.0
    %1804 = vmatpush2.msra.mxu0 0.0
    %1805 = vmatprep.subr.mxu0 0.0
    %1806 = vmatpush2.msra.mxu0 0.0
    %1807 = vmatprep.subr.mxu0 0.0
    %1808 = vmatpush2.msra.mxu0 0.0
    %1809 = vmatprep.subr.mxu0 0.0
    %1810 = vmatpush2.msra.mxu0 0.0
    %1811 = vmatprep.mubr.f32.mxu0 0.0
    %1812 = vmatmul.mubr.f32.gmra.mxu0 %v1675
    %v1813 = vpop.f32.mrf.mxu0
    %v1814 = vadd.f32 0.0, %v1813
    %v1815 = vpop.f32.mrf.mxu0
    %v1816 = vadd.f32 0.0, %v1815
    %1817 = vdwg.mxu0
    %v1818 = vadd.f32 %v467, %v1743
    %v1819 = vadd.f32 %v469, %v1745
    %v1820 = vadd.f32 %v580, %v1814
    %v1821 = vadd.f32 %v582, %v1816
    %v1822 = vxor.u32 %v1818, 2147483648
    %v1823 = vxor.u32 %v1819, 2147483648
    %v1824 = vxor.u32 %v1820, 2147483648
    %v1825 = vmul.f32 %v1822, 1.442695
    %v1826 = vpow.pop %v1825
    %v1827 = vmul.f32 %v1823, 1.442695
    %v1828 = vpow.pop %v1827
    %v1829 = vmul.f32 %v1824, 1.442695
    %v1830 = vpow.pop %v1829
    %v1831 = vadd.f32 %v1826, 1.0
    %v1832 = vadd.f32 %v1828, 1.0
    %v1833 = vadd.f32 %v1830, 1.0
    %v1834 = vrcp.pop %v1831
    %v1835 = vmul.f32 1.0, %v1834
    %v1836 = vrcp.pop %v1832
    %v1837 = vmul.f32 1.0, %v1836
    %v1838 = vrcp.pop %v1833
    %v1839 = vmul.f32 1.0, %v1838
    %v1840 = vtanh.pop %v1821
    %v1841 = vmul.f32 %v1837, %v1673
    %v1842 = vmul.f32 %v1835, %v1840
    %v1843 = vadd.f32 %v1841, %v1842
    %v1844 = vtanh.pop %v1843
    %v1845 = vmul.f32 %v1839, %v1844
    %1846 = vmatprep.subr.mxu0 %v653
    %1847 = vmatpush1.msra.mxu0 %v652
    %1848 = vmatprep.subr.mxu0 %v649
    %1849 = vmatpush1.msra.mxu0 %v648
    %1850 = vmatprep.subr.mxu0 %v645
    %1851 = vmatpush1.msra.mxu0 %v644
    %1852 = vmatprep.subr.mxu0 %v641
    %1853 = vmatpush1.msra.mxu0 %v640
    %1854 = vmatprep.subr.mxu0 %v637
    %1855 = vmatpush1.msra.mxu0 %v636
    %1856 = vmatprep.subr.mxu0 %v633
    %1857 = vmatpush1.msra.mxu0 %v632
    %1858 = vmatprep.subr.mxu0 %v629
    %1859 = vmatpush1.msra.mxu0 %v628
    %1860 = vmatprep.subr.mxu0 %v625
    %1861 = vmatpush1.msra.mxu0 %v624
    %1862 = vmatprep.subr.mxu0 %v621
    %1863 = vmatpush1.msra.mxu0 %v620
    %1864 = vmatprep.subr.mxu0 %v617
    %1865 = vmatpush1.msra.mxu0 %v616
    %1866 = vmatprep.subr.mxu0 %v613
    %1867 = vmatpush1.msra.mxu0 %v612
    %1868 = vmatprep.subr.mxu0 %v609
    %1869 = vmatpush1.msra.mxu0 %v608
    %1870 = vmatprep.subr.mxu0 %v605
    %1871 = vmatpush1.msra.mxu0 %v604
    %1872 = vmatprep.subr.mxu0 %v601
    %1873 = vmatpush1.msra.mxu0 %v600
    %1874 = vmatprep.subr.mxu0 %v597
    %1875 = vmatpush1.msra.mxu0 %v596
    %1876 = vmatprep.subr.mxu0 %v593
    %1877 = vmatpush1.msra.mxu0 %v592
    %1878 = vmatprep.subr.mxu0 0.0
    %1879 = vmatpush2.msra.mxu0 0.0
    %1880 = vmatprep.subr.mxu0 0.0
    %1881 = vmatpush2.msra.mxu0 0.0
    %1882 = vmatprep.subr.mxu0 0.0
    %1883 = vmatpush2.msra.mxu0 0.0
    %1884 = vmatprep.subr.mxu0 0.0
    %1885 = vmatpush2.msra.mxu0 0.0
    %1886 = vmatprep.subr.mxu0 0.0
    %1887 = vmatpush2.msra.mxu0 0.0
    %1888 = vmatprep.subr.mxu0 0.0
    %1889 = vmatpush2.msra.mxu0 0.0
    %1890 = vmatprep.subr.mxu0 0.0
    %1891 = vmatpush2.msra.mxu0 0.0
    %1892 = vmatprep.subr.mxu0 0.0
    %1893 = vmatpush2.msra.mxu0 0.0
    %1894 = vmatprep.subr.mxu0 0.0
    %1895 = vmatpush2.msra.mxu0 0.0
    %1896 = vmatprep.subr.mxu0 0.0
    %1897 = vmatpush2.msra.mxu0 0.0
    %1898 = vmatprep.subr.mxu0 0.0
    %1899 = vmatpush2.msra.mxu0 0.0
    %1900 = vmatprep.subr.mxu0 0.0
    %1901 = vmatpush2.msra.mxu0 0.0
    %1902 = vmatprep.subr.mxu0 0.0
    %1903 = vmatpush2.msra.mxu0 0.0
    %1904 = vmatprep.subr.mxu0 0.0
    %1905 = vmatpush2.msra.mxu0 0.0
    %1906 = vmatprep.subr.mxu0 0.0
    %1907 = vmatpush2.msra.mxu0 0.0
    %1908 = vmatprep.subr.mxu0 0.0
    %1909 = vmatpush2.msra.mxu0 0.0
    %1910 = vmatprep.mubr.f32.mxu0 0.0
    %1911 = vmatmul.mubr.f32.gmra.mxu0 %v1845
    %v1912 = vpop.f32.mrf.mxu0
    %v1913 = vadd.f32 0.0, %v1912
    %v1914 = vpop.f32.mrf.mxu0
    %v1915 = vadd.f32 0.0, %v1914
    %1916 = vdwg.mxu0
    %1917 = vmatprep.subr.mxu0 %v655
    %1918 = vmatpush1.msra.mxu0 %v654
    %1919 = vmatprep.subr.mxu0 %v651
    %1920 = vmatpush1.msra.mxu0 %v650
    %1921 = vmatprep.subr.mxu0 %v647
    %1922 = vmatpush1.msra.mxu0 %v646
    %1923 = vmatprep.subr.mxu0 %v643
    %1924 = vmatpush1.msra.mxu0 %v642
    %1925 = vmatprep.subr.mxu0 %v639
    %1926 = vmatpush1.msra.mxu0 %v638
    %1927 = vmatprep.subr.mxu0 %v635
    %1928 = vmatpush1.msra.mxu0 %v634
    %1929 = vmatprep.subr.mxu0 %v631
    %1930 = vmatpush1.msra.mxu0 %v630
    %1931 = vmatprep.subr.mxu0 %v627
    %1932 = vmatpush1.msra.mxu0 %v626
    %1933 = vmatprep.subr.mxu0 %v623
    %1934 = vmatpush1.msra.mxu0 %v622
    %1935 = vmatprep.subr.mxu0 %v619
    %1936 = vmatpush1.msra.mxu0 %v618
    %1937 = vmatprep.subr.mxu0 %v615
    %1938 = vmatpush1.msra.mxu0 %v614
    %1939 = vmatprep.subr.mxu0 %v611
    %1940 = vmatpush1.msra.mxu0 %v610
    %1941 = vmatprep.subr.mxu0 %v607
    %1942 = vmatpush1.msra.mxu0 %v606
    %1943 = vmatprep.subr.mxu0 %v603
    %1944 = vmatpush1.msra.mxu0 %v602
    %1945 = vmatprep.subr.mxu0 %v599
    %1946 = vmatpush1.msra.mxu0 %v598
    %1947 = vmatprep.subr.mxu0 %v595
    %1948 = vmatpush1.msra.mxu0 %v594
    %1949 = vmatprep.subr.mxu0 0.0
    %1950 = vmatpush2.msra.mxu0 0.0
    %1951 = vmatprep.subr.mxu0 0.0
    %1952 = vmatpush2.msra.mxu0 0.0
    %1953 = vmatprep.subr.mxu0 0.0
    %1954 = vmatpush2.msra.mxu0 0.0
    %1955 = vmatprep.subr.mxu0 0.0
    %1956 = vmatpush2.msra.mxu0 0.0
    %1957 = vmatprep.subr.mxu0 0.0
    %1958 = vmatpush2.msra.mxu0 0.0
    %1959 = vmatprep.subr.mxu0 0.0
    %1960 = vmatpush2.msra.mxu0 0.0
    %1961 = vmatprep.subr.mxu0 0.0
    %1962 = vmatpush2.msra.mxu0 0.0
    %1963 = vmatprep.subr.mxu0 0.0
    %1964 = vmatpush2.msra.mxu0 0.0
    %1965 = vmatprep.subr.mxu0 0.0
    %1966 = vmatpush2.msra.mxu0 0.0
    %1967 = vmatprep.subr.mxu0 0.0
    %1968 = vmatpush2.msra.mxu0 0.0
    %1969 = vmatprep.subr.mxu0 0.0
    %1970 = vmatpush2.msra.mxu0 0.0
    %1971 = vmatprep.subr.mxu0 0.0
    %1972 = vmatpush2.msra.mxu0 0.0
    %1973 = vmatprep.subr.mxu0 0.0
    %1974 = vmatpush2.msra.mxu0 0.0
    %1975 = vmatprep.subr.mxu0 0.0
    %1976 = vmatpush2.msra.mxu0 0.0
    %1977 = vmatprep.subr.mxu0 0.0
    %1978 = vmatpush2.msra.mxu0 0.0
    %1979 = vmatprep.subr.mxu0 0.0
    %1980 = vmatpush2.msra.mxu0 0.0
    %1981 = vmatprep.mubr.f32.mxu0 0.0
    %1982 = vmatmul.mubr.f32.gmra.mxu0 %v1845
    %v1983 = vpop.f32.mrf.mxu0
    %v1984 = vadd.f32 0.0, %v1983
    %v1985 = vpop.f32.mrf.mxu0
    %v1986 = vadd.f32 0.0, %v1985
    %1987 = vdwg.mxu0
    %v1988 = vadd.f32 %v473, %v1913
    %v1989 = vadd.f32 %v475, %v1915
    %v1990 = vadd.f32 %v586, %v1984
    %v1991 = vadd.f32 %v588, %v1986
    %v1992 = vxor.u32 %v1988, 2147483648
    %v1993 = vxor.u32 %v1989, 2147483648
    %v1994 = vxor.u32 %v1990, 2147483648
    %v1995 = vmul.f32 %v1992, 1.442695
    %v1996 = vpow.pop %v1995
    %v1997 = vmul.f32 %v1993, 1.442695
    %v1998 = vpow.pop %v1997
    %v1999 = vmul.f32 %v1994, 1.442695
    %v2000 = vpow.pop %v1999
    %v2001 = vadd.f32 %v1996, 1.0
    %v2002 = vadd.f32 %v1998, 1.0
    %v2003 = vadd.f32 %v2000, 1.0
    %v2004 = vrcp.pop %v2001
    %v2005 = vmul.f32 1.0, %v2004
    %v2006 = vrcp.pop %v2002
    %v2007 = vmul.f32 1.0, %v2006
    %v2008 = vrcp.pop %v2003
    %v2009 = vmul.f32 1.0, %v2008
    %v2010 = vtanh.pop %v1991
    %v2011 = vmul.f32 %v2007, %v1843
    %v2012 = vmul.f32 %v2005, %v2010
    %v2013 = vadd.f32 %v2011, %v2012
    %v2014 = vtanh.pop %v2013
    %v2015 = vmul.f32 %v2009, %v2014
    %2016 = vst [vmem:[#allocation8] sm:$0x3] %v2015
    %2017 = vst [vmem:[#allocation10] sm:$0x3] %v2013
    %v2018 = vcombine.low %v825, %v1165
    %v2020 = vunpack.c.l.s4 1983009808
    %v2021 = vunpack.c.0.s8 %v2020
    %v2022 = vlaneseq
    %v2023 = vshrl.u32 %v2022, 7
    %v2024 = vsub.s32 %v2021, %v2023
    %v2025 = vrot.slane %v2018, %v2024
    %v2026 = vcombine.low %v995, %v1335
    %v2028 = vunpack.c.l.s4 1983009808
    %v2029 = vunpack.c.0.s8 %v2028
    %v2030 = vlaneseq
    %v2031 = vshrl.u32 %v2030, 7
    %v2032 = vsub.s32 %v2029, %v2031
    %v2033 = vrot.slane %v2026, %v2032
    %v2034 = vcombine.low %v1505, %v1845
    %v2036 = vunpack.c.l.s4 1983009808
    %v2037 = vunpack.c.0.s8 %v2036
    %v2038 = vlaneseq
    %v2039 = vshrl.u32 %v2038, 7
    %v2040 = vsub.s32 %v2037, %v2039
    %v2041 = vrot.slane %v2034, %v2040
    %v2042 = vcombine.low %v1675, %v2015
    %v2044 = vunpack.c.l.s4 1983009808
    %v2045 = vunpack.c.0.s8 %v2044
    %v2046 = vlaneseq
    %v2047 = vshrl.u32 %v2046, 7
    %v2048 = vsub.s32 %v2045, %v2047
    %v2049 = vrot.slane %v2042, %v2048
    %v2050 = vcombine.low %v2025, %v2033
    %v2052 = vunpack.c.l.s4 1934713408
    %v2053 = vunpack.c.0.s8 %v2052
    %v2054 = vlaneseq
    %v2055 = vshrl.u32 %v2054, 7
    %v2056 = vsub.s32 %v2053, %v2055
    %v2057 = vrot.slane %v2050, %v2056
    %v2058 = vcombine.low %v2041, %v2049
    %v2060 = vunpack.c.l.s4 1934713408
    %v2061 = vunpack.c.0.s8 %v2060
    %v2062 = vlaneseq
    %v2063 = vshrl.u32 %v2062, 7
    %v2064 = vsub.s32 %v2061, %v2063
    %v2065 = vrot.slane %v2058, %v2064
    %v2066 = vcombine.low %v2057, %v2065
    %v2067 = vcombine.high %v2057, %v2065
    %v2068 = vld [vmem:[#allocation5] sm:$0xff]
    %v2069 = vld [vmem:[#allocation5 + $0x8] sm:$0xff]
    %v2070 = vld [vmem:[#allocation5 + $0x10] sm:$0xff]
    %v2071 = vld [vmem:[#allocation5 + $0x18] sm:$0xff]
    %v2072 = vld [vmem:[#allocation5 + $0x20] sm:$0xff]
    %v2073 = vld [vmem:[#allocation5 + $0x28] sm:$0xff]
    %v2074 = vld [vmem:[#allocation5 + $0x30] sm:$0xff]
    %v2075 = vld [vmem:[#allocation5 + $0x38] sm:$0xff]
    %v2076 = vld [vmem:[#allocation5 + $0x40] sm:$0xff]
    %v2077 = vld [vmem:[#allocation5 + $0x48] sm:$0xff]
    %v2078 = vld [vmem:[#allocation5 + $0x50] sm:$0xff]
    %v2079 = vld [vmem:[#allocation5 + $0x58] sm:$0xff]
    %v2080 = vld [vmem:[#allocation5 + $0x60] sm:$0xff]
    %v2081 = vld [vmem:[#allocation5 + $0x68] sm:$0xff]
    %v2082 = vld [vmem:[#allocation5 + $0x70] sm:$0xff]
    %v2083 = vld [vmem:[#allocation5 + $0x78] sm:$0xff]
    %v2084 = vld [vmem:[#allocation5 + $0x80] sm:$0xff]
    %v2085 = vld [vmem:[#allocation5 + $0x88] sm:$0xff]
    %v2086 = vld [vmem:[#allocation5 + $0x90] sm:$0xff]
    %v2087 = vld [vmem:[#allocation5 + $0x98] sm:$0xff]
    %v2088 = vld [vmem:[#allocation5 + $0xa0] sm:$0xff]
    %v2089 = vld [vmem:[#allocation5 + $0xa8] sm:$0xff]
    %v2090 = vld [vmem:[#allocation5 + $0xb0] sm:$0xff]
    %v2091 = vld [vmem:[#allocation5 + $0xb8] sm:$0xff]
    %v2092 = vld [vmem:[#allocation5 + $0xc0] sm:$0xff]
    %v2093 = vld [vmem:[#allocation5 + $0xc8] sm:$0xff]
    %v2094 = vld [vmem:[#allocation5 + $0xd0] sm:$0xff]
    %v2095 = vld [vmem:[#allocation5 + $0xd8] sm:$0xff]
    %v2096 = vld [vmem:[#allocation5 + $0xe0] sm:$0xff]
    %v2097 = vld [vmem:[#allocation5 + $0xe8] sm:$0xff]
    %v2098 = vld [vmem:[#allocation5 + $0xf0] sm:$0xff]
    %v2099 = vld [vmem:[#allocation5 + $0xf8] sm:$0xff]
    %v2100 = vld [vmem:[%s6] sm:$0x3]
    %v2102 = vlaneseq
    %v2103 = vshrl.u32 %v2102, 7
    %v2104 = vsub.s32 0, %v2103
    %v2105 = vrot.slane %v2100, %v2104
    %v2106 = vlaneseq
    %v2107 = vshrl.u32 %v2106, 7
    %v2108 = vsub.s32 1, %v2107
    %v2109 = vrot.slane %v2100, %v2108
    %2112 = vmatprep.subr.mxu0 %v2099
    %2113 = vmatpush1.msra.mxu0 %v2098
    %2114 = vmatprep.subr.mxu0 %v2097
    %2115 = vmatpush1.msra.mxu0 %v2096
    %2116 = vmatprep.subr.mxu0 %v2095
    %2117 = vmatpush1.msra.mxu0 %v2094
    %2118 = vmatprep.subr.mxu0 %v2093
    %2119 = vmatpush1.msra.mxu0 %v2092
    %2120 = vmatprep.subr.mxu0 %v2091
    %2121 = vmatpush1.msra.mxu0 %v2090
    %2122 = vmatprep.subr.mxu0 %v2089
    %2123 = vmatpush1.msra.mxu0 %v2088
    %2124 = vmatprep.subr.mxu0 %v2087
    %2125 = vmatpush1.msra.mxu0 %v2086
    %2126 = vmatprep.subr.mxu0 %v2085
    %2127 = vmatpush1.msra.mxu0 %v2084
    %2128 = vmatprep.subr.mxu0 %v2083
    %2129 = vmatpush1.msra.mxu0 %v2082
    %2130 = vmatprep.subr.mxu0 %v2081
    %2131 = vmatpush1.msra.mxu0 %v2080
    %2132 = vmatprep.subr.mxu0 %v2079
    %2133 = vmatpush1.msra.mxu0 %v2078
    %2134 = vmatprep.subr.mxu0 %v2077
    %2135 = vmatpush1.msra.mxu0 %v2076
    %2136 = vmatprep.subr.mxu0 %v2075
    %2137 = vmatpush1.msra.mxu0 %v2074
    %2138 = vmatprep.subr.mxu0 %v2073
    %2139 = vmatpush1.msra.mxu0 %v2072
    %2140 = vmatprep.subr.mxu0 %v2071
    %2141 = vmatpush1.msra.mxu0 %v2070
    %2142 = vmatprep.subr.mxu0 %v2069
    %2143 = vmatpush1.msra.mxu0 %v2068
    %2144 = vmatprep.subr.mxu0 0.0
    %2145 = vmatpush2.msra.mxu0 0.0
    %2146 = vmatprep.subr.mxu0 0.0
    %2147 = vmatpush2.msra.mxu0 0.0
    %2148 = vmatprep.subr.mxu0 0.0
    %2149 = vmatpush2.msra.mxu0 0.0
    %2150 = vmatprep.subr.mxu0 0.0
    %2151 = vmatpush2.msra.mxu0 0.0
    %2152 = vmatprep.subr.mxu0 0.0
    %2153 = vmatpush2.msra.mxu0 0.0
    %2154 = vmatprep.subr.mxu0 0.0
    %2155 = vmatpush2.msra.mxu0 0.0
    %2156 = vmatprep.subr.mxu0 0.0
    %2157 = vmatpush2.msra.mxu0 0.0
    %2158 = vmatprep.subr.mxu0 0.0
    %2159 = vmatpush2.msra.mxu0 0.0
    %2160 = vmatprep.subr.mxu0 0.0
    %2161 = vmatpush2.msra.mxu0 0.0
    %2162 = vmatprep.subr.mxu0 0.0
    %2163 = vmatpush2.msra.mxu0 0.0
    %2164 = vmatprep.subr.mxu0 0.0
    %2165 = vmatpush2.msra.mxu0 0.0
    %2166 = vmatprep.subr.mxu0 0.0
    %2167 = vmatpush2.msra.mxu0 0.0
    %2168 = vmatprep.subr.mxu0 0.0
    %2169 = vmatpush2.msra.mxu0 0.0
    %2170 = vmatprep.subr.mxu0 0.0
    %2171 = vmatpush2.msra.mxu0 0.0
    %2172 = vmatprep.subr.mxu0 0.0
    %2173 = vmatpush2.msra.mxu0 0.0
    %2174 = vmatprep.subr.mxu0 0.0
    %2175 = vmatpush2.msra.mxu0 0.0
    %2176 = vmatprep.mubr.f32.mxu0 0.0
    %2177 = vmatmul.mubr.f32.gmra.mxu0 %v2066
    %v2178 = vpop.f32.mrf.mxu0
    %v2179 = vadd.f32 %v2105, %v2178
    %v2180 = vpop.f32.mrf.mxu0
    %v2181 = vadd.f32 %v2109, %v2180
    %2182 = vmatprep.mubr.f32.mxu0 0.0
    %2183 = vmatmul.mubr.f32.gmra.mxu0 %v2067
    %v2184 = vpop.f32.mrf.mxu0
    %v2185 = vadd.f32 %v2105, %v2184
    %v2186 = vpop.f32.mrf.mxu0
    %v2187 = vadd.f32 %v2109, %v2186
    %2188 = vdwg.mxu0
    %2189 = vst [vmem:[#allocation7] sm:$0xff] %v2179
    %2190 = vst [vmem:[#allocation7 + $0x8] sm:$0xff] %v2181
    %2191 = vst [vmem:[#allocation7 + $0x10] sm:$0xff] %v2185
    %2192 = vst [vmem:[#allocation7 + $0x18] sm:$0xff] %v2187
    // Predicated region
    $region46: #{tpu_custom_call.1} parent=1 // pred_check
      _
    $region47: #{tpu_custom_call.1} parent=1 // pred_check_branch
      %2194 = sbr.rel (0) target = $region49
    $region48: #{tpu_custom_call.1} parent=1 // pred_region
      %s2196 = ssub.s32 512, 512
      %2197 = vsyncadd [#allocation4], %s2196
      %s2198 = sshll.u32 [#allocation7], 4
      %s2199 = int_to_ptr.vmem [resolvable:$true] %s2198
      %2204 = dma.vmem_to_hbm [thread:$0]  %s2199, 512, %s9, [#allocation4], 256, 256, 16
    $region49: #{tpu_custom_call.1} parent=1 // pred_fallthru
      _
    // Predicated region
    $region50: #{tpu_custom_call.1} parent=1 // pred_check
      _
    $region51: #{tpu_custom_call.1} parent=1 // pred_check_branch
      %2206 = sbr.rel (0) target = $region53
    $region52: #{tpu_custom_call.1} parent=1 // pred_region
      %s2208 = ssub.s32 32, 32
      %2209 = vsyncadd [#allocation9], %s2208
      %s2211 = sshll.u32 [#allocation8], 4
      %s2212 = int_to_ptr.vmem [resolvable:$true] %s2211
      %2214 = dma.vmem_to_hbm [thread:$0]  %s2212, 32, %s10, [#allocation9]
    $region53: #{tpu_custom_call.1} parent=1 // pred_fallthru
      _
    // Predicated region
    $region54: #{tpu_custom_call.1} parent=1 // pred_check
      _
    $region55: #{tpu_custom_call.1} parent=1 // pred_check_branch
      %2216 = sbr.rel (0) target = $region57
    $region56: #{tpu_custom_call.1} parent=1 // pred_region
      %s2218 = ssub.s32 32, 32
      %2219 = vsyncadd [#allocation9], %s2218
      %s2221 = sshll.u32 [#allocation10], 4
      %s2222 = int_to_ptr.vmem [resolvable:$true] %s2221
      %2224 = dma.vmem_to_hbm [thread:$0]  %s2222, 32, %s11, [#allocation9]
    $region57: #{tpu_custom_call.1} parent=1 // pred_fallthru
      _
    // Predicated region
    $region58: #{tpu_custom_call.1} parent=1 // pred_check
      _
    $region59: #{tpu_custom_call.1} parent=1 // pred_check_branch
      %2226 = sbr.rel (0) target = $region61
    $region60: #{tpu_custom_call.1} parent=1 // pred_region
      %2227 = dma.done [#allocation4], 512
    $region61: #{tpu_custom_call.1} parent=1 // pred_fallthru
      _
    // Predicated region
    $region62: #{tpu_custom_call.1} parent=1 // pred_check
      _
    $region63: #{tpu_custom_call.1} parent=1 // pred_check_branch
      %2229 = sbr.rel (0) target = $region65
    $region64: #{tpu_custom_call.1} parent=1 // pred_region
      %2230 = dma.done [#allocation9], 32
    $region65: #{tpu_custom_call.1} parent=1 // pred_fallthru
      _
    // Predicated region
    $region66: #{tpu_custom_call.1} parent=1 // pred_check
      _
    $region67: #{tpu_custom_call.1} parent=1 // pred_check_branch
      %2232 = sbr.rel (0) target = $region69
    $region68: #{tpu_custom_call.1} parent=1 // pred_region
      %2233 = dma.done [#allocation9], 32
    $region69: #{tpu_custom_call.1} parent=1 // pred_fallthru
      _
    %2234 = vsyncpa [#allocation3], 1
    %2235 = vsyncpa [#allocation6], 1
    %2236 = vsyncpa [#allocation4], 1
    %2237 = vsyncpa [#allocation9], 1

</llo_original>
